<compile_context>
chip_gen: v6e
topology: v6e:2x2x1
jax: 0.10.0
libtpu: 0.0.40
codegen_flags: <defaults>
</compile_context>

<pallas_src>
import functools

import jax
import jax.numpy as jnp
from jax import lax
from jax.experimental import pallas as pl
from jax.experimental.pallas import tpu as pltpu


# ------------------------------- kernel --------------------------------------

def _sandglass_kernel(identity,
                      x_ref, c1_ref, b1_ref, bd_ref, b23_ref, c2_ref, b4_ref,
                      out_ref):
    H = x_ref.shape[1]
    x = x_ref[0].astype(jnp.float32)              # (H, W*C), lane-dense

    # (H, H) row-shift matrices: sh_up picks row y-1 (zero row at the top),
    # sh_dn picks row y+1 (zero row at the bottom).  Built from iotas so the
    # vertical conv halo needs no padded scratch / concatenation.
    row = lax.broadcasted_iota(jnp.int32, (H, H), 0)
    col = lax.broadcasted_iota(jnp.int32, (H, H), 1)
    sh_up = (col == row - 1).astype(jnp.float32)
    sh_dn = (col == row + 1).astype(jnp.float32)

    def dw3x3(v, c_ref, bias):
        # Depthwise 3x3 conv (pad 1, stride 1, groups=C) as three banded
        # (W*C, W*C) matmuls; horizontal taps + per-channel weights are inside
        # the band matrices, vertical taps are the row shifts.
        v_up = jnp.dot(sh_up, v, preferred_element_type=jnp.float32)
        v_dn = jnp.dot(sh_dn, v, preferred_element_type=jnp.float32)
        acc = jnp.dot(v_up, c_ref[0], preferred_element_type=jnp.float32)
        acc = acc + jnp.dot(v, c_ref[1], preferred_element_type=jnp.float32)
        acc = acc + jnp.dot(v_dn, c_ref[2], preferred_element_type=jnp.float32)
        return acc + bias

    # dw3x3 + BN1 (scale folded into c1) + ReLU6
    t = jnp.clip(dw3x3(x, c1_ref, b1_ref[...]), 0.0, 6.0)
    # fused 1x1 reduce + BN2 + 1x1 expand + BN3 (folded into bd / b23) + ReLU6
    e = jnp.clip(jnp.dot(t, bd_ref[...], preferred_element_type=jnp.float32)
                 + b23_ref[...], 0.0, 6.0)
    # dw3x3 + BN4 (scale folded into c2)
    y = dw3x3(e, c2_ref, b4_ref[...])
    if identity:                                  # residual (stride==1, in==out)
        y = y + x
    out_ref[0] = y.astype(out_ref.dtype)


# ------------------------- wrapper / parameter folding -----------------------

def _fold_and_flatten(params, W, C):
    """Fold BN into weights and build the lane-dense matrices for the kernel."""
    WC = W * C
    s1 = params["s1"].reshape(C); b1 = params["b1"].reshape(C)
    s2 = params["s2"].reshape(-1); b2 = params["b2"].reshape(-1)
    s3 = params["s3"].reshape(C); b3 = params["b3"].reshape(C)
    s4 = params["s4"].reshape(C); b4 = params["b4"].reshape(C)

    k1 = params["w1"] * s1[None, None, :]          # (3, 3, C), BN1 scale folded
    k2 = params["w4"] * s4[None, None, :]          # (3, 3, C), BN4 scale folded

    def band(k):
        # Band matrix B_dy[(w'*C + c), (w*C + c)] = k[dy, (w'-w)+1, c]
        # for |w'-w| <= 1, zero otherwise (also gives the zero W-halo for free).
        mats = []
        for dy in range(3):
            m = jnp.zeros((WC, WC), jnp.float32)
            for d in (-1, 0, 1):                   # d = w' - w
                m = m + jnp.kron(jnp.eye(W, k=-d, dtype=jnp.float32),
                                 jnp.diag(k[dy, d + 1, :]))
            mats.append(m)
        return jnp.stack(mats, axis=0)             # (3, WC, WC)

    c1 = band(k1)
    c2 = band(k2)

    # Fuse conv2 (1x1 C->hid) + BN2 + conv3 (1x1 hid->C) + BN3-scale.
    w23 = ((params["w2"] * s2[None, :]) @ params["w3"]) * s3[None, :]   # (C, C)
    b23 = (b2 @ params["w3"]) * s3 + b3                                 # (C,)
    bd = jnp.kron(jnp.eye(W, dtype=jnp.float32), w23)                   # (WC, WC)

    b1f = jnp.tile(b1, W).reshape(1, WC)
    b23f = jnp.tile(b23, W).reshape(1, WC)
    b4f = jnp.tile(b4, W).reshape(1, WC)
    return c1, b1f, bd, b23f, c2, b4f


def sandglass_forward(x_nhwc, params, stride):
    """x_nhwc: (N, H, W, C) float32."""
    N, H, W, C = x_nhwc.shape
    WC = W * C
    identity = (stride == 1) and (params["w3"].shape[1] == C)

    x_flat = x_nhwc.reshape(N, H, WC)              # lane-dense: last dim = W*C
    c1, b1f, bd, b23f, c2, b4f = _fold_and_flatten(params, W, C)
    kernel = functools.partial(_sandglass_kernel, identity)

    grid_spec = pltpu.PrefetchScalarGridSpec(
        num_scalar_prefetch=0,
        grid=(N,),                                  # parallel -> both TCs on v7x
        in_specs=[
            pl.BlockSpec((1, H, WC), lambda n: (n, 0, 0)),   # x (lane-dense)
            pl.BlockSpec((3, WC, WC), lambda n: (0, 0, 0)),  # c1 band matrices
            pl.BlockSpec((1, WC), lambda n: (0, 0)),         # b1
            pl.BlockSpec((WC, WC), lambda n: (0, 0)),        # fused 1x1 (block-diag)
            pl.BlockSpec((1, WC), lambda n: (0, 0)),         # b23
            pl.BlockSpec((3, WC, WC), lambda n: (0, 0, 0)),  # c2 band matrices
            pl.BlockSpec((1, WC), lambda n: (0, 0)),         # b4
        ],
        out_specs=pl.BlockSpec((1, H, WC), lambda n: (n, 0, 0)),
    )

    out = pl.pallas_call(
        kernel,
        out_shape=jax.ShapeDtypeStruct((N, H, WC), x_nhwc.dtype),
        grid_spec=grid_spec,
        compiler_params=pltpu.CompilerParams(
            dimension_semantics=("parallel",)),
    )(x_flat, c1, b1f, bd, b23f, c2, b4f)

    out = out.reshape(N, H, W, C)
    if stride > 1:
        # TODO(synk): compute the strided output directly in-kernel instead of
        # subsampling the stride-1 result.
        out = out[:, ::stride, ::stride, :]
    return out


# ----------------------- parameter init + pure-JAX reference -----------------

def fold_bn(key, c, eps=1e-5):
    """Deterministic BN params folded into per-channel (scale, bias)."""
    k1, k2, k3, k4 = jax.random.split(key, 4)
    gamma = 1.0 + 0.1 * jax.random.normal(k1, (c,), jnp.float32)
    beta = 0.1 * jax.random.normal(k2, (c,), jnp.float32)
    mean = 0.1 * jax.random.normal(k3, (c,), jnp.float32)
    var = jnp.abs(jax.random.normal(k4, (c,), jnp.float32)) + 0.5
    scale = gamma / jnp.sqrt(var + eps)
    bias = beta - mean * scale
    return scale.reshape(1, c), bias.reshape(1, c)


def reference(x, p, stride, identity):
    """Plain-JAX NHWC reference (lax convs) for validation."""
    C = x.shape[-1]

    def dw(x, w, s):
        k = w.reshape(3, 3, 1, C)                  # HWIO, I = in/groups = 1
        return lax.conv_general_dilated(
            x, k, window_strides=(s, s), padding=((1, 1), (1, 1)),
            dimension_numbers=('NHWC', 'HWIO', 'NHWC'),
            feature_group_count=C)

    def pw(x, w):
        cin, cout = w.shape
        k = w.reshape(1, 1, cin, cout)
        return lax.conv_general_dilated(
            x, k, window_strides=(1, 1), padding='VALID',
            dimension_numbers=('NHWC', 'HWIO', 'NHWC'))

    t = jnp.clip(dw(x, p["w1"], 1) * p["s1"] + p["b1"], 0.0, 6.0)
    t = pw(t, p["w2"]) * p["s2"] + p["b2"]
    t = jnp.clip(pw(t, p["w3"]) * p["s3"] + p["b3"], 0.0, 6.0)
    t = dw(t, p["w4"], stride) * p["s4"] + p["b4"]
    if identity:
        t = t + x
    return t


if __name__ == "__main__":
    # SandGlassLayer(inputs=8, outputs=8, stride=1, reduction_ratio=2)
    # (BatchNorm2d(inputs) after the first conv requires outputs == inputs.)
    N, C, H, W = 2, 8, 16, 16
    inputs = outputs = C
    stride = 1
    reduction_ratio = 2
    Hd = round(inputs // reduction_ratio)
    identity = (stride == 1 and inputs == outputs)

    keys = jax.random.split(jax.random.PRNGKey(0), 10)
    x = jax.random.normal(keys[0], (N, H, W, C), jnp.float32)

    params = {
        "w1": 0.2 * jax.random.normal(keys[1], (3, 3, C), jnp.float32),   # dw conv1
        "w2": 0.2 * jax.random.normal(keys[3], (C, Hd), jnp.float32),     # 1x1 reduce
        "w3": 0.2 * jax.random.normal(keys[5], (Hd, C), jnp.float32),     # 1x1 expand
        "w4": 0.2 * jax.random.normal(keys[7], (3, 3, C), jnp.float32),   # dw conv2
    }
    params["s1"], params["b1"] = fold_bn(keys[2], C)
    params["s2"], params["b2"] = fold_bn(keys[4], Hd)
    params["s3"], params["b3"] = fold_bn(keys[6], C)
    params["s4"], params["b4"] = fold_bn(keys[8], C)

    out = sandglass_forward(x, params, stride)
    out = jax.block_until_ready(out)

    ref = reference(x, params, stride, identity)
    err = float(jnp.max(jnp.abs(out - ref)))
    assert jnp.allclose(out, ref, atol=1e-3, rtol=1e-3), f"max abs err {err}"
    print("KERNEL_OK")
</pallas_src>

<mosaic_0001>
module attributes {stable_mosaic.version = 11 : i64} {
  func.func @_sandglass_kernel(%arg0: i32, %arg1: memref<1x16x128xf32, #tpu.memory_space<vmem>>, %arg2: memref<3x128x128xf32, #tpu.memory_space<vmem>>, %arg3: memref<1x128xf32, #tpu.memory_space<vmem>>, %arg4: memref<128x128xf32, #tpu.memory_space<vmem>>, %arg5: memref<1x128xf32, #tpu.memory_space<vmem>>, %arg6: memref<3x128x128xf32, #tpu.memory_space<vmem>>, %arg7: memref<1x128xf32, #tpu.memory_space<vmem>>, %arg8: memref<1x16x128xf32, #tpu.memory_space<vmem>>) attributes {dimension_semantics = [#tpu.dimension_semantics<parallel>], iteration_bounds = array<i64: 2>, scalar_prefetch = 0 : i64, scratch_operands = 0 : i64, tpu.core_type = #tpu.core_type<tc>, window_params = [{transform_indices = @transform_0, window_bounds = array<i64: 1, 16, 128>}, {pipeline_mode = #tpu.pipeline_mode<synchronous>, transform_indices = @transform_1, window_bounds = array<i64: 3, 128, 128>}, {pipeline_mode = #tpu.pipeline_mode<synchronous>, transform_indices = @transform_2, window_bounds = array<i64: 1, 128>}, {pipeline_mode = #tpu.pipeline_mode<synchronous>, transform_indices = @transform_3, window_bounds = array<i64: 128, 128>}, {pipeline_mode = #tpu.pipeline_mode<synchronous>, transform_indices = @transform_4, window_bounds = array<i64: 1, 128>}, {pipeline_mode = #tpu.pipeline_mode<synchronous>, transform_indices = @transform_5, window_bounds = array<i64: 3, 128, 128>}, {pipeline_mode = #tpu.pipeline_mode<synchronous>, transform_indices = @transform_6, window_bounds = array<i64: 1, 128>}, {transform_indices = @transform_7, window_bounds = array<i64: 1, 16, 128>}]} {
    %c0 = arith.constant 0 : index
    %c0_0 = arith.constant 0 : index
    %c0_1 = arith.constant 0 : index
    %0 = vector.load %arg1[%c0, %c0_0, %c0_1] : memref<1x16x128xf32, #tpu.memory_space<vmem>>, vector<1x16x128xf32>
    %1 = vector.shape_cast %0 : vector<1x16x128xf32> to vector<16x128xf32>
    %2 = tpu.iota {dimensions = array<i32: 0>} : vector<16x16xi32>
    %3 = tpu.iota {dimensions = array<i32: 1>} : vector<16x16xi32>
    %c1_i32 = arith.constant 1 : i32
    %4 = vector.broadcast %c1_i32 : i32 to vector<16x16xi32>
    %5 = arith.subi %2, %4 : vector<16x16xi32>
    %6 = arith.cmpi eq, %3, %5 : vector<16x16xi32>
    %7 = arith.extui %6 : vector<16x16xi1> to vector<16x16xi32>
    %8 = arith.sitofp %7 : vector<16x16xi32> to vector<16x16xf32>
    %c1_i32_2 = arith.constant 1 : i32
    %9 = vector.broadcast %c1_i32_2 : i32 to vector<16x16xi32>
    %10 = arith.addi %2, %9 : vector<16x16xi32>
    %11 = arith.cmpi eq, %3, %10 : vector<16x16xi32>
    %12 = arith.extui %11 : vector<16x16xi1> to vector<16x16xi32>
    %13 = arith.sitofp %12 : vector<16x16xi32> to vector<16x16xf32>
    %c0_3 = arith.constant 0 : index
    %c0_4 = arith.constant 0 : index
    %14 = vector.load %arg3[%c0_3, %c0_4] : memref<1x128xf32, #tpu.memory_space<vmem>>, vector<1x128xf32>
    %cst = arith.constant dense<0.000000e+00> : vector<16x128xf32>
    %15 = tpu.matmul %8, %1, %cst {dimension_numbers = #tpu.dot_dimension_numbers<[1], [0], [0], [1], [0, 0, 1, 1], [], []>} : vector<16x16xf32>, vector<16x128xf32>, vector<16x128xf32> -> vector<16x128xf32>
    %cst_5 = arith.constant dense<0.000000e+00> : vector<16x128xf32>
    %16 = tpu.matmul %13, %1, %cst_5 {dimension_numbers = #tpu.dot_dimension_numbers<[1], [0], [0], [1], [0, 0, 1, 1], [], []>} : vector<16x16xf32>, vector<16x128xf32>, vector<16x128xf32> -> vector<16x128xf32>
    %c0_6 = arith.constant 0 : index
    %c0_7 = arith.constant 0 : index
    %c0_8 = arith.constant 0 : index
    %17 = vector.load %arg2[%c0_6, %c0_7, %c0_8] : memref<3x128x128xf32, #tpu.memory_space<vmem>>, vector<1x128x128xf32>
    %18 = vector.shape_cast %17 : vector<1x128x128xf32> to vector<128x128xf32>
    %cst_9 = arith.constant dense<0.000000e+00> : vector<16x128xf32>
    %19 = tpu.matmul %15, %18, %cst_9 {dimension_numbers = #tpu.dot_dimension_numbers<[1], [0], [0], [1], [0, 0, 1, 1], [], []>} : vector<16x128xf32>, vector<128x128xf32>, vector<16x128xf32> -> vector<16x128xf32>
    %c1 = arith.constant 1 : index
    %c0_10 = arith.constant 0 : index
    %c0_11 = arith.constant 0 : index
    %20 = vector.load %arg2[%c1, %c0_10, %c0_11] : memref<3x128x128xf32, #tpu.memory_space<vmem>>, vector<1x128x128xf32>
    %21 = vector.shape_cast %20 : vector<1x128x128xf32> to vector<128x128xf32>
    %cst_12 = arith.constant dense<0.000000e+00> : vector<16x128xf32>
    %22 = tpu.matmul %1, %21, %cst_12 {dimension_numbers = #tpu.dot_dimension_numbers<[1], [0], [0], [1], [0, 0, 1, 1], [], []>} : vector<16x128xf32>, vector<128x128xf32>, vector<16x128xf32> -> vector<16x128xf32>
    %23 = arith.addf %19, %22 : vector<16x128xf32>
    %c2 = arith.constant 2 : index
    %c0_13 = arith.constant 0 : index
    %c0_14 = arith.constant 0 : index
    %24 = vector.load %arg2[%c2, %c0_13, %c0_14] : memref<3x128x128xf32, #tpu.memory_space<vmem>>, vector<1x128x128xf32>
    %25 = vector.shape_cast %24 : vector<1x128x128xf32> to vector<128x128xf32>
    %cst_15 = arith.constant dense<0.000000e+00> : vector<16x128xf32>
    %26 = tpu.matmul %16, %25, %cst_15 {dimension_numbers = #tpu.dot_dimension_numbers<[1], [0], [0], [1], [0, 0, 1, 1], [], []>} : vector<16x128xf32>, vector<128x128xf32>, vector<16x128xf32> -> vector<16x128xf32>
    %27 = arith.addf %23, %26 : vector<16x128xf32>
    %28 = vector.broadcast %14 : vector<1x128xf32> to vector<16x128xf32>
    %29 = arith.addf %27, %28 : vector<16x128xf32>
    %cst_16 = arith.constant 0.000000e+00 : f32
    %cst_17 = arith.constant 6.000000e+00 : f32
    %30 = vector.broadcast %cst_16 : f32 to vector<16x128xf32>
    %31 = arith.maximumf %30, %29 : vector<16x128xf32>
    %32 = vector.broadcast %cst_17 : f32 to vector<16x128xf32>
    %33 = arith.minimumf %32, %31 : vector<16x128xf32>
    %c0_18 = arith.constant 0 : index
    %c0_19 = arith.constant 0 : index
    %34 = vector.load %arg4[%c0_18, %c0_19] : memref<128x128xf32, #tpu.memory_space<vmem>>, vector<128x128xf32>
    %cst_20 = arith.constant dense<0.000000e+00> : vector<16x128xf32>
    %35 = tpu.matmul %33, %34, %cst_20 {dimension_numbers = #tpu.dot_dimension_numbers<[1], [0], [0], [1], [0, 0, 1, 1], [], []>} : vector<16x128xf32>, vector<128x128xf32>, vector<16x128xf32> -> vector<16x128xf32>
    %c0_21 = arith.constant 0 : index
    %c0_22 = arith.constant 0 : index
    %36 = vector.load %arg5[%c0_21, %c0_22] : memref<1x128xf32, #tpu.memory_space<vmem>>, vector<1x128xf32>
    %37 = vector.broadcast %36 : vector<1x128xf32> to vector<16x128xf32>
    %38 = arith.addf %35, %37 : vector<16x128xf32>
    %cst_23 = arith.constant 0.000000e+00 : f32
    %cst_24 = arith.constant 6.000000e+00 : f32
    %39 = vector.broadcast %cst_23 : f32 to vector<16x128xf32>
    %40 = arith.maximumf %39, %38 : vector<16x128xf32>
    %41 = vector.broadcast %cst_24 : f32 to vector<16x128xf32>
    %42 = arith.minimumf %41, %40 : vector<16x128xf32>
    %c0_25 = arith.constant 0 : index
    %c0_26 = arith.constant 0 : index
    %43 = vector.load %arg7[%c0_25, %c0_26] : memref<1x128xf32, #tpu.memory_space<vmem>>, vector<1x128xf32>
    %cst_27 = arith.constant dense<0.000000e+00> : vector<16x128xf32>
    %44 = tpu.matmul %8, %42, %cst_27 {dimension_numbers = #tpu.dot_dimension_numbers<[1], [0], [0], [1], [0, 0, 1, 1], [], []>} : vector<16x16xf32>, vector<16x128xf32>, vector<16x128xf32> -> vector<16x128xf32>
    %cst_28 = arith.constant dense<0.000000e+00> : vector<16x128xf32>
    %45 = tpu.matmul %13, %42, %cst_28 {dimension_numbers = #tpu.dot_dimension_numbers<[1], [0], [0], [1], [0, 0, 1, 1], [], []>} : vector<16x16xf32>, vector<16x128xf32>, vector<16x128xf32> -> vector<16x128xf32>
    %c0_29 = arith.constant 0 : index
    %c0_30 = arith.constant 0 : index
    %c0_31 = arith.constant 0 : index
    %46 = vector.load %arg6[%c0_29, %c0_30, %c0_31] : memref<3x128x128xf32, #tpu.memory_space<vmem>>, vector<1x128x128xf32>
    %47 = vector.shape_cast %46 : vector<1x128x128xf32> to vector<128x128xf32>
    %cst_32 = arith.constant dense<0.000000e+00> : vector<16x128xf32>
    %48 = tpu.matmul %44, %47, %cst_32 {dimension_numbers = #tpu.dot_dimension_numbers<[1], [0], [0], [1], [0, 0, 1, 1], [], []>} : vector<16x128xf32>, vector<128x128xf32>, vector<16x128xf32> -> vector<16x128xf32>
    %c1_33 = arith.constant 1 : index
    %c0_34 = arith.constant 0 : index
    %c0_35 = arith.constant 0 : index
    %49 = vector.load %arg6[%c1_33, %c0_34, %c0_35] : memref<3x128x128xf32, #tpu.memory_space<vmem>>, vector<1x128x128xf32>
    %50 = vector.shape_cast %49 : vector<1x128x128xf32> to vector<128x128xf32>
    %cst_36 = arith.constant dense<0.000000e+00> : vector<16x128xf32>
    %51 = tpu.matmul %42, %50, %cst_36 {dimension_numbers = #tpu.dot_dimension_numbers<[1], [0], [0], [1], [0, 0, 1, 1], [], []>} : vector<16x128xf32>, vector<128x128xf32>, vector<16x128xf32> -> vector<16x128xf32>
    %52 = arith.addf %48, %51 : vector<16x128xf32>
    %c2_37 = arith.constant 2 : index
    %c0_38 = arith.constant 0 : index
    %c0_39 = arith.constant 0 : index
    %53 = vector.load %arg6[%c2_37, %c0_38, %c0_39] : memref<3x128x128xf32, #tpu.memory_space<vmem>>, vector<1x128x128xf32>
    %54 = vector.shape_cast %53 : vector<1x128x128xf32> to vector<128x128xf32>
    %cst_40 = arith.constant dense<0.000000e+00> : vector<16x128xf32>
    %55 = tpu.matmul %45, %54, %cst_40 {dimension_numbers = #tpu.dot_dimension_numbers<[1], [0], [0], [1], [0, 0, 1, 1], [], []>} : vector<16x128xf32>, vector<128x128xf32>, vector<16x128xf32> -> vector<16x128xf32>
    %56 = arith.addf %52, %55 : vector<16x128xf32>
    %57 = vector.broadcast %43 : vector<1x128xf32> to vector<16x128xf32>
    %58 = arith.addf %56, %57 : vector<16x128xf32>
    %59 = arith.addf %58, %1 : vector<16x128xf32>
    %c0_41 = arith.constant 0 : index
    %c0_42 = arith.constant 0 : index
    %c0_43 = arith.constant 0 : index
    %60 = vector.load %arg8[%c0_41, %c0_42, %c0_43] : memref<1x16x128xf32, #tpu.memory_space<vmem>>, vector<1x16x128xf32>
    %61 = vector.shape_cast %60 : vector<1x16x128xf32> to vector<16x128xf32>
    %62 = vector.shape_cast %59 : vector<16x128xf32> to vector<1x16x128xf32>
    tpu.vector_store %arg8[%c0_41, %c0_42, %c0_43], %62 {strides = array<i32>} : memref<1x16x128xf32, #tpu.memory_space<vmem>>, vector<1x16x128xf32>,
    return
  }
  func.func @transform_0(%arg0: i32) -> (i32, i32, i32) {
    %c0_i32 = arith.constant 0 : i32
    %c0_i32_0 = arith.constant 0 : i32
    %c0_i32_1 = arith.constant 0 : i32
    return %arg0, %c0_i32, %c0_i32_0 : i32, i32, i32
  }
  func.func @transform_1(%arg0: i32) -> (i32, i32, i32) {
    %c0_i32 = arith.constant 0 : i32
    %c0_i32_0 = arith.constant 0 : i32
    %c0_i32_1 = arith.constant 0 : i32
    %c0_i32_2 = arith.constant 0 : i32
    return %c0_i32, %c0_i32_0, %c0_i32_1 : i32, i32, i32
  }
  func.func @transform_2(%arg0: i32) -> (i32, i32) {
    %c0_i32 = arith.constant 0 : i32
    %c0_i32_0 = arith.constant 0 : i32
    %c0_i32_1 = arith.constant 0 : i32
    return %c0_i32, %c0_i32_0 : i32, i32
  }
  func.func @transform_3(%arg0: i32) -> (i32, i32) {
    %c0_i32 = arith.constant 0 : i32
    %c0_i32_0 = arith.constant 0 : i32
    %c0_i32_1 = arith.constant 0 : i32
    return %c0_i32, %c0_i32_0 : i32, i32
  }
  func.func @transform_4(%arg0: i32) -> (i32, i32) {
    %c0_i32 = arith.constant 0 : i32
    %c0_i32_0 = arith.constant 0 : i32
    %c0_i32_1 = arith.constant 0 : i32
    return %c0_i32, %c0_i32_0 : i32, i32
  }
  func.func @transform_5(%arg0: i32) -> (i32, i32, i32) {
    %c0_i32 = arith.constant 0 : i32
    %c0_i32_0 = arith.constant 0 : i32
    %c0_i32_1 = arith.constant 0 : i32
    %c0_i32_2 = arith.constant 0 : i32
    return %c0_i32, %c0_i32_0, %c0_i32_1 : i32, i32, i32
  }
  func.func @transform_6(%arg0: i32) -> (i32, i32) {
    %c0_i32 = arith.constant 0 : i32
    %c0_i32_0 = arith.constant 0 : i32
    %c0_i32_1 = arith.constant 0 : i32
    return %c0_i32, %c0_i32_0 : i32, i32
  }
  func.func @transform_7(%arg0: i32) -> (i32, i32, i32) {
    %c0_i32 = arith.constant 0 : i32
    %c0_i32_0 = arith.constant 0 : i32
    %c0_i32_1 = arith.constant 0 : i32
    return %arg0, %c0_i32, %c0_i32_0 : i32, i32, i32
  }
}

</mosaic_0001>

<llo_original>
// kernel: tpu_custom_call.1
$region0: #{tpu_custom_call.1}
  #allocation0 [shape = 'u32[]', space=smem, size = 0x4, offset = 0x4, fixed_abs, tag = 'smem constant byte address 0x4 - core index']
  #allocation1 [shape = 'u32[144,128]{1,0:T(1,128)}', space=vmem, size = 0x12000, scoped, tag = 'internal scratch']
  %s0 = inlined_call_operand.hbm [shape: f32[2,16,128], index: 0, kind: input, shape index: {}]
  %s1 = inlined_call_operand.hbm [shape: f32[3,128,128], index: 1, kind: input, shape index: {}]
  %s2 = inlined_call_operand.vmem [shape: f32[1,128], index: 2, kind: input, shape index: {}]
  %s3 = inlined_call_operand.hbm [shape: f32[128,128], index: 3, kind: input, shape index: {}]
  %s4 = inlined_call_operand.vmem [shape: f32[1,128], index: 4, kind: input, shape index: {}]
  %s5 = inlined_call_operand.hbm [shape: f32[3,128,128], index: 5, kind: input, shape index: {}]
  %s6 = inlined_call_operand.vmem [shape: f32[1,128], index: 6, kind: input, shape index: {}]
  %s7 = inlined_call_operand.hbm [shape: f32[2,16,128], index: 7, kind: output, shape index: {}]
  %s8 = sld [smem:[#allocation0]]
  $region77: #{tpu_custom_call.1} parent=0
    _
  %s10 = ssub.s32 1, %s8
  %s11 = scalar_select 0, %s10, %s8
  $region1: #{tpu_custom_call.1} parent=0
    #allocation2 [shape = 'u8[16384]{0}', space=vmem, size = 0x4000, scoped, tag = 'input window, operand 0']
    #allocation3 [shape = 's32[2]{0}', space=sflag, size = 0x8, scoped, tag = 'scoped memory for tpu_custom_call.1']
    #allocation4 [shape = 's32[2]{0}', space=sflag, size = 0x8, scoped, tag = 'scoped memory for tpu_custom_call.1']
    #allocation5 [shape = 'u8[196608]{0}', space=vmem, size = 0x30000, scoped, tag = 'input window, operand 1, single buffered']
    #allocation6 [shape = 's32[1]{0}', space=sflag, size = 0x4, scoped, tag = 'scoped memory for tpu_custom_call.1']
    #allocation7 [shape = 'u8[65536]{0}', space=vmem, size = 0x10000, scoped, tag = 'input window, operand 3, single buffered']
    #allocation8 [shape = 'u8[196608]{0}', space=vmem, size = 0x30000, scoped, tag = 'input window, operand 5, single buffered']
    #allocation9 [shape = 's32[1]{0}', space=sflag, size = 0x4, scoped, tag = 'scoped memory for tpu_custom_call.1']
    #allocation10 [shape = 'u8[16384]{0}', space=vmem, size = 0x4000, scoped, tag = 'output window, operand 0']
    %12 = vsyncpa [#allocation3], 0
    %s13 = scalar_lea.sflag [#allocation3], 1
    %14 = vsyncpa %s13, 0
    %15 = vsyncpa [#allocation6], 0
    %16 = vsyncpa [#allocation9], 0
    %17 = vsyncpa [#allocation4], 0
    %s18 = scalar_lea.sflag [#allocation4], 1
    %19 = vsyncpa %s18, 0
    loop: start=0, step=1, limit=4
    $region2: #{tpu_custom_call.1} parent=1 // loop_pre_header
      _
    $region3: #{tpu_custom_call.1} parent=1 // loop_header
      %s21 = sphi 0, %s25
      %p22 = scmp.ge.s32.totalorder %s21, 4
      %s31 = sphi 0, %s33
      %s34 = sphi 0, %s31
      %s35 = sphi 0, %s34
      %s51 = sphi 0, %s35
      %s55 = sphi 0, %s55
      %s57 = sphi 0, %s55
      %s58 = sphi 0, %s57
      %s72 = sphi 0, %s58
      %s76 = sphi 0, %s76
      %s78 = sphi 0, %s76
      %s79 = sphi 0, %s78
      %s93 = sphi 0, %s79
      %s97 = sphi 0, %s97
      %s99 = sphi 0, %s97
      %s100 = sphi 0, %s99
      %s114 = sphi 0, %s100
      %s118 = sphi 0, %s118
      %s120 = sphi 0, %s118
      %s121 = sphi 0, %s120
      %s135 = sphi 0, %s121
      %s139 = sphi 0, %s139
      %s141 = sphi 0, %s139
      %s142 = sphi 0, %s141
      %s156 = sphi 0, %s142
      %s160 = sphi 0, %s160
      %s162 = sphi 0, %s160
      %s163 = sphi 0, %s162
      %s177 = sphi 0, %s163
      %s183 = sphi 0, %s185
      %s186 = sphi 0, %s183
      %s187 = sphi 0, %s186
      %s203 = sphi 0, %s187
    $region4: #{tpu_custom_call.1} parent=1 // loop_header_branch
      %24 = sbr.rel (%p22) target = $region8
    $region5: #{tpu_custom_call.1} parent=1 // loop_body
      %s26 = ssub.s32 %s21, 1
      %s27 = ssub.s32 %s21, 2
      %s28 = sadd.s32 %s21, 1
      %s29 = ssub.s32 %s21, %s28
      %p30 = scmp.eq.s32.totalorder %s29, 0
      %s32 = sadd.s32 %s31, 1
      %s33 = scalar_select %p30, %s31, %s32
      %p36 = pneg %p30
      %p37 = scmp.eq.s32.totalorder %s21, 1
      %p38 = por %p36, %p37
      %p39 = scmp.ne.s32.totalorder %s31, %s34
      %p40 = scmp.eq.s32.totalorder %s21, 0
      %p41 = por %p39, %p40
      %p42 = scmp.ne.s32.totalorder %s31, %s34
      %p43 = scmp.eq.s32.totalorder %s26, 1
      %p44 = por %p42, %p43
      %p45 = scmp.ne.s32.totalorder %s34, %s35
      %p46 = scmp.eq.s32.totalorder %s26, 0
      %p47 = por %p45, %p46
      %p48 = scmp.ne.s32.totalorder %s34, %s35
      %p49 = scmp.eq.s32.totalorder %s27, 1
      %p50 = por %p48, %p49
      %p52 = scmp.ne.s32.totalorder %s35, %s51
      %p53 = scmp.eq.s32.totalorder %s27, 0
      %p54 = por %p52, %p53
      %s56 = sadd.s32 %s55, 1
      %p59 = scmp.eq.s32.totalorder %s21, 1
      %p60 = scmp.ne.s32.totalorder %s55, %s57
      %p61 = scmp.eq.s32.totalorder %s21, 0
      %p62 = por %p60, %p61
      %p63 = scmp.ne.s32.totalorder %s55, %s57
      %p64 = scmp.eq.s32.totalorder %s26, 1
      %p65 = por %p63, %p64
      %p66 = scmp.ne.s32.totalorder %s57, %s58
      %p67 = scmp.eq.s32.totalorder %s26, 0
      %p68 = por %p66, %p67
      %p69 = scmp.ne.s32.totalorder %s57, %s58
      %p70 = scmp.eq.s32.totalorder %s27, 1
      %p71 = por %p69, %p70
      %p73 = scmp.ne.s32.totalorder %s58, %s72
      %p74 = scmp.eq.s32.totalorder %s27, 0
      %p75 = por %p73, %p74
      %s77 = sadd.s32 %s76, 1
      %p80 = scmp.eq.s32.totalorder %s21, 1
      %p81 = scmp.ne.s32.totalorder %s76, %s78
      %p82 = scmp.eq.s32.totalorder %s21, 0
      %p83 = por %p81, %p82
      %p84 = scmp.ne.s32.totalorder %s76, %s78
      %p85 = scmp.eq.s32.totalorder %s26, 1
      %p86 = por %p84, %p85
      %p87 = scmp.ne.s32.totalorder %s78, %s79
      %p88 = scmp.eq.s32.totalorder %s26, 0
      %p89 = por %p87, %p88
      %p90 = scmp.ne.s32.totalorder %s78, %s79
      %p91 = scmp.eq.s32.totalorder %s27, 1
      %p92 = por %p90, %p91
      %p94 = scmp.ne.s32.totalorder %s79, %s93
      %p95 = scmp.eq.s32.totalorder %s27, 0
      %p96 = por %p94, %p95
      %s98 = sadd.s32 %s97, 1
      %p101 = scmp.eq.s32.totalorder %s21, 1
      %p102 = scmp.ne.s32.totalorder %s97, %s99
      %p103 = scmp.eq.s32.totalorder %s21, 0
      %p104 = por %p102, %p103
      %p105 = scmp.ne.s32.totalorder %s97, %s99
      %p106 = scmp.eq.s32.totalorder %s26, 1
      %p107 = por %p105, %p106
      %p108 = scmp.ne.s32.totalorder %s99, %s100
      %p109 = scmp.eq.s32.totalorder %s26, 0
      %p110 = por %p108, %p109
      %p111 = scmp.ne.s32.totalorder %s99, %s100
      %p112 = scmp.eq.s32.totalorder %s27, 1
      %p113 = por %p111, %p112
      %p115 = scmp.ne.s32.totalorder %s100, %s114
      %p116 = scmp.eq.s32.totalorder %s27, 0
      %p117 = por %p115, %p116
      %s119 = sadd.s32 %s118, 1
      %p122 = scmp.eq.s32.totalorder %s21, 1
      %p123 = scmp.ne.s32.totalorder %s118, %s120
      %p124 = scmp.eq.s32.totalorder %s21, 0
      %p125 = por %p123, %p124
      %p126 = scmp.ne.s32.totalorder %s118, %s120
      %p127 = scmp.eq.s32.totalorder %s26, 1
      %p128 = por %p126, %p127
      %p129 = scmp.ne.s32.totalorder %s120, %s121
      %p130 = scmp.eq.s32.totalorder %s26, 0
      %p131 = por %p129, %p130
      %p132 = scmp.ne.s32.totalorder %s120, %s121
      %p133 = scmp.eq.s32.totalorder %s27, 1
      %p134 = por %p132, %p133
      %p136 = scmp.ne.s32.totalorder %s121, %s135
      %p137 = scmp.eq.s32.totalorder %s27, 0
      %p138 = por %p136, %p137
      %s140 = sadd.s32 %s139, 1
      %p143 = scmp.eq.s32.totalorder %s21, 1
      %p144 = scmp.ne.s32.totalorder %s139, %s141
      %p145 = scmp.eq.s32.totalorder %s21, 0
      %p146 = por %p144, %p145
      %p147 = scmp.ne.s32.totalorder %s139, %s141
      %p148 = scmp.eq.s32.totalorder %s26, 1
      %p149 = por %p147, %p148
      %p150 = scmp.ne.s32.totalorder %s141, %s142
      %p151 = scmp.eq.s32.totalorder %s26, 0
      %p152 = por %p150, %p151
      %p153 = scmp.ne.s32.totalorder %s141, %s142
      %p154 = scmp.eq.s32.totalorder %s27, 1
      %p155 = por %p153, %p154
      %p157 = scmp.ne.s32.totalorder %s142, %s156
      %p158 = scmp.eq.s32.totalorder %s27, 0
      %p159 = por %p157, %p158
      %s161 = sadd.s32 %s160, 1
      %p164 = scmp.eq.s32.totalorder %s21, 1
      %p165 = scmp.ne.s32.totalorder %s160, %s162
      %p166 = scmp.eq.s32.totalorder %s21, 0
      %p167 = por %p165, %p166
      %p168 = scmp.ne.s32.totalorder %s160, %s162
      %p169 = scmp.eq.s32.totalorder %s26, 1
      %p170 = por %p168, %p169
      %p171 = scmp.ne.s32.totalorder %s162, %s163
      %p172 = scmp.eq.s32.totalorder %s26, 0
      %p173 = por %p171, %p172
      %p174 = scmp.ne.s32.totalorder %s162, %s163
      %p175 = scmp.eq.s32.totalorder %s27, 1
      %p176 = por %p174, %p175
      %p178 = scmp.ne.s32.totalorder %s163, %s177
      %p179 = scmp.eq.s32.totalorder %s27, 0
      %p180 = por %p178, %p179
      %s181 = ssub.s32 %s21, %s28
      %p182 = scmp.eq.s32.totalorder %s181, 0
      %s184 = sadd.s32 %s183, 1
      %s185 = scalar_select %p182, %s183, %s184
      %p188 = pneg %p182
      %p189 = scmp.eq.s32.totalorder %s21, 1
      %p190 = por %p188, %p189
      %p191 = scmp.ne.s32.totalorder %s183, %s186
      %p192 = scmp.eq.s32.totalorder %s21, 0
      %p193 = por %p191, %p192
      %p194 = scmp.ne.s32.totalorder %s183, %s186
      %p195 = scmp.eq.s32.totalorder %s26, 1
      %p196 = por %p194, %p195
      %p197 = scmp.ne.s32.totalorder %s186, %s187
      %p198 = scmp.eq.s32.totalorder %s26, 0
      %p199 = por %p197, %p198
      %p200 = scmp.ne.s32.totalorder %s186, %s187
      %p201 = scmp.eq.s32.totalorder %s27, 1
      %p202 = por %p200, %p201
      %p204 = scmp.ne.s32.totalorder %s187, %s203
      %p205 = scmp.eq.s32.totalorder %s27, 0
      %p206 = por %p204, %p205
      %p207 = scmp.le.s32.totalorder 1, %s21
      %p208 = scmp.lt.s32.totalorder %s21, 3
      %p209 = pnand %p207, %p208
      %p210 = pneg %p209
      // Predicated region
      $region9: #{tpu_custom_call.1} parent=5 // pred_check
        _
      $region10: #{tpu_custom_call.1} parent=5 // pred_check_branch
        %212 = sbr.rel (%p209) target = $region12
      $region11: #{tpu_custom_call.1} parent=5 // pred_region
        %s213 = ssub.s32 %s21, 1
        // Predicated region
        $region13: #{tpu_custom_call.1} parent=11 // pred_check
          %p214 = pneg %p68
        $region14: #{tpu_custom_call.1} parent=11 // pred_check_branch
          %216 = sbr.rel (%p214) target = $region16
        $region15: #{tpu_custom_call.1} parent=11 // pred_region
          %s218 = ssub.s32 6144, 6144
          %219 = vsyncadd [#allocation6], %s218
          %s220 = sshll.u32 [#allocation5], 4
          %s221 = int_to_ptr.vmem [resolvable:$true] %s220
          %226 = dma.hbm_to_vmem [thread:$0]  %s1, 6144, %s221, [#allocation6], 128, 128, 8
        $region16: #{tpu_custom_call.1} parent=11 // pred_fallthru
          _
        // Predicated region
        $region17: #{tpu_custom_call.1} parent=11 // pred_check
          %p227 = pneg %p89
        $region18: #{tpu_custom_call.1} parent=11 // pred_check_branch
          %229 = sbr.rel (%p227) target = $region20
        $region19: #{tpu_custom_call.1} parent=11 // pred_region
          _
        $region20: #{tpu_custom_call.1} parent=11 // pred_fallthru
          _
        // Predicated region
        $region21: #{tpu_custom_call.1} parent=11 // pred_check
          %p230 = pneg %p110
        $region22: #{tpu_custom_call.1} parent=11 // pred_check_branch
          %232 = sbr.rel (%p230) target = $region24
        $region23: #{tpu_custom_call.1} parent=11 // pred_region
          %s234 = ssub.s32 2048, 2048
          %235 = vsyncadd [#allocation6], %s234
          %s236 = sshll.u32 [#allocation7], 4
          %s237 = int_to_ptr.vmem [resolvable:$true] %s236
          %242 = dma.hbm_to_vmem [thread:$0]  %s3, 2048, %s237, [#allocation6], 128, 128, 8
        $region24: #{tpu_custom_call.1} parent=11 // pred_fallthru
          _
        // Predicated region
        $region25: #{tpu_custom_call.1} parent=11 // pred_check
          %p243 = pneg %p131
        $region26: #{tpu_custom_call.1} parent=11 // pred_check_branch
          %245 = sbr.rel (%p243) target = $region28
        $region27: #{tpu_custom_call.1} parent=11 // pred_region
          _
        $region28: #{tpu_custom_call.1} parent=11 // pred_fallthru
          _
        // Predicated region
        $region29: #{tpu_custom_call.1} parent=11 // pred_check
          %p246 = pneg %p152
        $region30: #{tpu_custom_call.1} parent=11 // pred_check_branch
          %248 = sbr.rel (%p246) target = $region32
        $region31: #{tpu_custom_call.1} parent=11 // pred_region
          %s250 = ssub.s32 6144, 6144
          %251 = vsyncadd [#allocation9], %s250
          %s252 = sshll.u32 [#allocation8], 4
          %s253 = int_to_ptr.vmem [resolvable:$true] %s252
          %258 = dma.hbm_to_vmem [thread:$0]  %s5, 6144, %s253, [#allocation9], 128, 128, 8
        $region32: #{tpu_custom_call.1} parent=11 // pred_fallthru
          _
        // Predicated region
        $region33: #{tpu_custom_call.1} parent=11 // pred_check
          %p259 = pneg %p173
        $region34: #{tpu_custom_call.1} parent=11 // pred_check_branch
          %261 = sbr.rel (%p259) target = $region36
        $region35: #{tpu_custom_call.1} parent=11 // pred_region
          _
        $region36: #{tpu_custom_call.1} parent=11 // pred_fallthru
          _
      $region12: #{tpu_custom_call.1} parent=5 // pred_fallthru
        _
      %p262 = scmp.lt.s32.totalorder %s21, 2
      // Predicated region
      $region37: #{tpu_custom_call.1} parent=5 // pred_check
        %p263 = pneg %p262
      $region38: #{tpu_custom_call.1} parent=5 // pred_check_branch
        %265 = sbr.rel (%p263) target = $region40
      $region39: #{tpu_custom_call.1} parent=5 // pred_region
        // Predicated region
        $region41: #{tpu_custom_call.1} parent=39 // pred_check
          %p266 = pneg %p41
        $region42: #{tpu_custom_call.1} parent=39 // pred_check_branch
          %268 = sbr.rel (%p266) target = $region44
        $region43: #{tpu_custom_call.1} parent=39 // pred_region
          %s269 = sand.u32 %s31, 1
          %s270 = scalar_lea.sflag [#allocation3], %s269
          %s271 = sand.u32 %s31, 1
          %s272 = smul.addr %s271, 16
          %s273 = scalar_lea.vmem [#allocation2], %s272
          %s275 = ssub.s32 256, 256
          %276 = vsyncadd %s270, %s275
          %s277 = smul.addr %s21, 2
          %s278 = smul.addr %s277, 128
          %s279 = scalar_lea.hbm %s0, %s278
          %s280 = sshll.u32 %s273, 4
          %s281 = int_to_ptr.vmem [resolvable:$true] %s280
          %286 = dma.hbm_to_vmem [thread:$0]  %s279, 256, %s281, %s270, 128, 128, 8
        $region44: #{tpu_custom_call.1} parent=39 // pred_fallthru
          _
      $region40: #{tpu_custom_call.1} parent=5 // pred_fallthru
        _
      %p287 = scmp.le.s32.totalorder 1, %s21
      %p288 = scmp.lt.s32.totalorder %s21, 3
      %p289 = pnand %p287, %p288
      %p290 = pneg %p289
      // Predicated region
      $region45: #{tpu_custom_call.1} parent=5 // pred_check
        _
      $region46: #{tpu_custom_call.1} parent=5 // pred_check_branch
        %292 = sbr.rel (%p289) target = $region48
      $region47: #{tpu_custom_call.1} parent=5 // pred_region
        %s293 = ssub.s32 %s21, 1
        %s294 = sand.u32 %s34, 1
        %s295 = scalar_lea.sflag [#allocation3], %s294
        %s296 = sand.u32 %s34, 1
        %s297 = smul.addr %s296, 16
        %s298 = scalar_lea.vmem [#allocation2], %s297
        // Predicated region
        $region49: #{tpu_custom_call.1} parent=47 // pred_check
          %p299 = pneg %p47
        $region50: #{tpu_custom_call.1} parent=47 // pred_check_branch
          %301 = sbr.rel (%p299) target = $region52
        $region51: #{tpu_custom_call.1} parent=47 // pred_region
          %302 = dma.done %s295, 256
        $region52: #{tpu_custom_call.1} parent=47 // pred_fallthru
          _
        // Predicated region
        $region53: #{tpu_custom_call.1} parent=47 // pred_check
          %p303 = pneg %p68
        $region54: #{tpu_custom_call.1} parent=47 // pred_check_branch
          %305 = sbr.rel (%p303) target = $region56
        $region55: #{tpu_custom_call.1} parent=47 // pred_region
          %306 = dma.done [#allocation6], 6144
        $region56: #{tpu_custom_call.1} parent=47 // pred_fallthru
          _
        // Predicated region
        $region57: #{tpu_custom_call.1} parent=47 // pred_check
          %p307 = pneg %p110
        $region58: #{tpu_custom_call.1} parent=47 // pred_check_branch
          %309 = sbr.rel (%p307) target = $region60
        $region59: #{tpu_custom_call.1} parent=47 // pred_region
          %310 = dma.done [#allocation6], 2048
        $region60: #{tpu_custom_call.1} parent=47 // pred_fallthru
          _
        // Predicated region
        $region61: #{tpu_custom_call.1} parent=47 // pred_check
          %p311 = pneg %p152
        $region62: #{tpu_custom_call.1} parent=47 // pred_check_branch
          %313 = sbr.rel (%p311) target = $region64
        $region63: #{tpu_custom_call.1} parent=47 // pred_region
          %314 = dma.done [#allocation9], 6144
        $region64: #{tpu_custom_call.1} parent=47 // pred_fallthru
          _
        %s315 = sand.u32 %s34, 1
        %s316 = scalar_lea.sflag [#allocation3], %s315
        %s317 = sand.u32 %s34, 1
        %s318 = smul.addr %s317, 16
        %s319 = scalar_lea.vmem [#allocation2], %s318
        %p320 = pneg %p47
        %p321 = pneg %p44
        %p322 = pneg %p68
        %p323 = pneg %p65
        %p324 = pneg %p89
        %p325 = pneg %p86
        %p326 = pneg %p110
        %p327 = pneg %p107
        %p328 = pneg %p131
        %p329 = pneg %p128
        %p330 = pneg %p152
        %p331 = pneg %p149
        %p332 = pneg %p173
        %p333 = pneg %p170
        %p334 = pneg %p199
        %p335 = pneg %p196
        %s336 = sand.u32 %s186, 1
        %s337 = scalar_lea.sflag [#allocation4], %s336
        %s338 = sand.u32 %s186, 1
        %s339 = smul.addr %s338, 16
        %s340 = scalar_lea.vmem [#allocation10], %s339
        %v341 = vld [vmem:[%s298] sm:$0xff]
        %v342 = vld [vmem:[%s298 + $0x8] sm:$0xff]
        %v343 = vlaneseq
        %v344 = vshrl.u32 %v343, 7
        %v345 = vadd.s32 %v344, 8
        %v346 = vlaneseq
        %v347 = vand.u32 %v346, 127
        %v348 = vsub.s32 %v344, 1
        %v349 = vsub.s32 %v345, 1
        %vm350 = vcmp.eq.s32.totalorder %v347, %v348
        %vm351 = vcmp.eq.s32.totalorder %v347, %v349
        %v352 = vsel %vm350, 1, 0
        %v353 = vsel %vm351, 1, 0
        %v354 = vcvt.s32.f32 %v352
        %v355 = vcvt.s32.f32 %v353
        %v356 = vadd.s32 %v344, 1
        %v357 = vadd.s32 %v345, 1
        %vm358 = vcmp.eq.s32.totalorder %v347, %v356
        %vm359 = vcmp.eq.s32.totalorder %v347, %v357
        %v360 = vsel %vm358, 1, 0
        %v361 = vsel %vm359, 1, 0
        %v362 = vcvt.s32.f32 %v360
        %v363 = vcvt.s32.f32 %v361
        %v364 = vld [vmem:[%s2] sm:$0x1]
        %vm365 = vcmask 130048
        %v367 = vsel %vm365, %v354, 0
        %v370 = vsel %vm365, %v355, 0
        %372 = vmatprep.subr.mxu0 0.0
        %373 = vmatpush1.msra.mxu0 0.0
        %374 = vmatprep.subr.mxu0 0.0
        %375 = vmatpush1.msra.mxu0 0.0
        %376 = vmatprep.subr.mxu0 0.0
        %377 = vmatpush1.msra.mxu0 0.0
        %378 = vmatprep.subr.mxu0 0.0
        %379 = vmatpush1.msra.mxu0 0.0
        %380 = vmatprep.subr.mxu0 0.0
        %381 = vmatpush1.msra.mxu0 0.0
        %382 = vmatprep.subr.mxu0 0.0
        %383 = vmatpush1.msra.mxu0 0.0
        %384 = vmatprep.subr.mxu0 0.0
        %385 = vmatpush1.msra.mxu0 0.0
        %386 = vmatprep.subr.mxu0 0.0
        %387 = vmatpush1.msra.mxu0 0.0
        %388 = vmatprep.subr.mxu0 0.0
        %389 = vmatpush1.msra.mxu0 0.0
        %390 = vmatprep.subr.mxu0 0.0
        %391 = vmatpush1.msra.mxu0 0.0
        %392 = vmatprep.subr.mxu0 0.0
        %393 = vmatpush1.msra.mxu0 0.0
        %394 = vmatprep.subr.mxu0 0.0
        %395 = vmatpush1.msra.mxu0 0.0
        %396 = vmatprep.subr.mxu0 0.0
        %397 = vmatpush1.msra.mxu0 0.0
        %398 = vmatprep.subr.mxu0 0.0
        %399 = vmatpush1.msra.mxu0 0.0
        %400 = vmatprep.subr.mxu0 0.0
        %401 = vmatpush1.msra.mxu0 %v342
        %402 = vmatprep.subr.mxu0 0.0
        %403 = vmatpush1.msra.mxu0 %v341
        %404 = vmatprep.subr.mxu0 0.0
        %405 = vmatpush2.msra.mxu0 0.0
        %406 = vmatprep.subr.mxu0 0.0
        %407 = vmatpush2.msra.mxu0 0.0
        %408 = vmatprep.subr.mxu0 0.0
        %409 = vmatpush2.msra.mxu0 0.0
        %410 = vmatprep.subr.mxu0 0.0
        %411 = vmatpush2.msra.mxu0 0.0
        %412 = vmatprep.subr.mxu0 0.0
        %413 = vmatpush2.msra.mxu0 0.0
        %414 = vmatprep.subr.mxu0 0.0
        %415 = vmatpush2.msra.mxu0 0.0
        %416 = vmatprep.subr.mxu0 0.0
        %417 = vmatpush2.msra.mxu0 0.0
        %418 = vmatprep.subr.mxu0 0.0
        %419 = vmatpush2.msra.mxu0 0.0
        %420 = vmatprep.subr.mxu0 0.0
        %421 = vmatpush2.msra.mxu0 0.0
        %422 = vmatprep.subr.mxu0 0.0
        %423 = vmatpush2.msra.mxu0 0.0
        %424 = vmatprep.subr.mxu0 0.0
        %425 = vmatpush2.msra.mxu0 0.0
        %426 = vmatprep.subr.mxu0 0.0
        %427 = vmatpush2.msra.mxu0 0.0
        %428 = vmatprep.subr.mxu0 0.0
        %429 = vmatpush2.msra.mxu0 0.0
        %430 = vmatprep.subr.mxu0 0.0
        %431 = vmatpush2.msra.mxu0 0.0
        %432 = vmatprep.subr.mxu0 0.0
        %433 = vmatpush2.msra.mxu0 0.0
        %434 = vmatprep.subr.mxu0 0.0
        %435 = vmatpush2.msra.mxu0 0.0
        %436 = vmatprep.mubr.f32.mxu0 0.0
        %437 = vmatmul.mubr.f32.gmra.mxu0 %v367
        %v438 = vpop.f32.mrf.mxu0
        %v439 = vadd.f32 0.0, %v438
        %v440 = vpop.f32.mrf.mxu0
        %441 = vmatprep.mubr.f32.mxu0 0.0
        %442 = vmatmul.mubr.f32.gmra.mxu0 %v370
        %v443 = vpop.f32.mrf.mxu0
        %v444 = vadd.f32 0.0, %v443
        %v445 = vpop.f32.mrf.mxu0
        %446 = vdwg.mxu0
        %v448 = vsel %vm365, %v362, 0
        %v451 = vsel %vm365, %v363, 0
        %453 = vmatprep.subr.mxu0 0.0
        %454 = vmatpush1.msra.mxu0 0.0
        %455 = vmatprep.subr.mxu0 0.0
        %456 = vmatpush1.msra.mxu0 0.0
        %457 = vmatprep.subr.mxu0 0.0
        %458 = vmatpush1.msra.mxu0 0.0
        %459 = vmatprep.subr.mxu0 0.0
        %460 = vmatpush1.msra.mxu0 0.0
        %461 = vmatprep.subr.mxu0 0.0
        %462 = vmatpush1.msra.mxu0 0.0
        %463 = vmatprep.subr.mxu0 0.0
        %464 = vmatpush1.msra.mxu0 0.0
        %465 = vmatprep.subr.mxu0 0.0
        %466 = vmatpush1.msra.mxu0 0.0
        %467 = vmatprep.subr.mxu0 0.0
        %468 = vmatpush1.msra.mxu0 0.0
        %469 = vmatprep.subr.mxu0 0.0
        %470 = vmatpush1.msra.mxu0 0.0
        %471 = vmatprep.subr.mxu0 0.0
        %472 = vmatpush1.msra.mxu0 0.0
        %473 = vmatprep.subr.mxu0 0.0
        %474 = vmatpush1.msra.mxu0 0.0
        %475 = vmatprep.subr.mxu0 0.0
        %476 = vmatpush1.msra.mxu0 0.0
        %477 = vmatprep.subr.mxu0 0.0
        %478 = vmatpush1.msra.mxu0 0.0
        %479 = vmatprep.subr.mxu0 0.0
        %480 = vmatpush1.msra.mxu0 0.0
        %481 = vmatprep.subr.mxu0 0.0
        %482 = vmatpush1.msra.mxu0 %v342
        %483 = vmatprep.subr.mxu0 0.0
        %484 = vmatpush1.msra.mxu0 %v341
        %485 = vmatprep.subr.mxu0 0.0
        %486 = vmatpush2.msra.mxu0 0.0
        %487 = vmatprep.subr.mxu0 0.0
        %488 = vmatpush2.msra.mxu0 0.0
        %489 = vmatprep.subr.mxu0 0.0
        %490 = vmatpush2.msra.mxu0 0.0
        %491 = vmatprep.subr.mxu0 0.0
        %492 = vmatpush2.msra.mxu0 0.0
        %493 = vmatprep.subr.mxu0 0.0
        %494 = vmatpush2.msra.mxu0 0.0
        %495 = vmatprep.subr.mxu0 0.0
        %496 = vmatpush2.msra.mxu0 0.0
        %497 = vmatprep.subr.mxu0 0.0
        %498 = vmatpush2.msra.mxu0 0.0
        %499 = vmatprep.subr.mxu0 0.0
        %500 = vmatpush2.msra.mxu0 0.0
        %501 = vmatprep.subr.mxu0 0.0
        %502 = vmatpush2.msra.mxu0 0.0
        %503 = vmatprep.subr.mxu0 0.0
        %504 = vmatpush2.msra.mxu0 0.0
        %505 = vmatprep.subr.mxu0 0.0
        %506 = vmatpush2.msra.mxu0 0.0
        %507 = vmatprep.subr.mxu0 0.0
        %508 = vmatpush2.msra.mxu0 0.0
        %509 = vmatprep.subr.mxu0 0.0
        %510 = vmatpush2.msra.mxu0 0.0
        %511 = vmatprep.subr.mxu0 0.0
        %512 = vmatpush2.msra.mxu0 0.0
        %513 = vmatprep.subr.mxu0 0.0
        %514 = vmatpush2.msra.mxu0 0.0
        %515 = vmatprep.subr.mxu0 0.0
        %516 = vmatpush2.msra.mxu0 0.0
        %517 = vmatprep.mubr.f32.mxu0 0.0
        %518 = vmatmul.mubr.f32.gmra.mxu0 %v448
        %v519 = vpop.f32.mrf.mxu0
        %v520 = vadd.f32 0.0, %v519
        %v521 = vpop.f32.mrf.mxu0
        %522 = vmatprep.mubr.f32.mxu0 0.0
        %523 = vmatmul.mubr.f32.gmra.mxu0 %v451
        %v524 = vpop.f32.mrf.mxu0
        %v525 = vadd.f32 0.0, %v524
        %v526 = vpop.f32.mrf.mxu0
        %527 = vdwg.mxu0
        %v528 = vld [vmem:[#allocation5] sm:$0xff]
        %v529 = vld [vmem:[#allocation5 + $0x8] sm:$0xff]
        %v530 = vld [vmem:[#allocation5 + $0x10] sm:$0xff]
        %v531 = vld [vmem:[#allocation5 + $0x18] sm:$0xff]
        %v532 = vld [vmem:[#allocation5 + $0x20] sm:$0xff]
        %v533 = vld [vmem:[#allocation5 + $0x28] sm:$0xff]
        %v534 = vld [vmem:[#allocation5 + $0x30] sm:$0xff]
        %v535 = vld [vmem:[#allocation5 + $0x38] sm:$0xff]
        %v536 = vld [vmem:[#allocation5 + $0x40] sm:$0xff]
        %v537 = vld [vmem:[#allocation5 + $0x48] sm:$0xff]
        %v538 = vld [vmem:[#allocation5 + $0x50] sm:$0xff]
        %v539 = vld [vmem:[#allocation5 + $0x58] sm:$0xff]
        %v540 = vld [vmem:[#allocation5 + $0x60] sm:$0xff]
        %v541 = vld [vmem:[#allocation5 + $0x68] sm:$0xff]
        %v542 = vld [vmem:[#allocation5 + $0x70] sm:$0xff]
        %v543 = vld [vmem:[#allocation5 + $0x78] sm:$0xff]
        %s544 = scalar_lea.vmem [#allocation5], 128
        %v545 = vld [vmem:[%s544] sm:$0xff]
        %v546 = vld [vmem:[%s544 + $0x8] sm:$0xff]
        %v547 = vld [vmem:[%s544 + $0x10] sm:$0xff]
        %v548 = vld [vmem:[%s544 + $0x18] sm:$0xff]
        %v549 = vld [vmem:[%s544 + $0x20] sm:$0xff]
        %v550 = vld [vmem:[%s544 + $0x28] sm:$0xff]
        %v551 = vld [vmem:[%s544 + $0x30] sm:$0xff]
        %v552 = vld [vmem:[%s544 + $0x38] sm:$0xff]
        %v553 = vld [vmem:[%s544 + $0x40] sm:$0xff]
        %v554 = vld [vmem:[%s544 + $0x48] sm:$0xff]
        %v555 = vld [vmem:[%s544 + $0x50] sm:$0xff]
        %v556 = vld [vmem:[%s544 + $0x58] sm:$0xff]
        %v557 = vld [vmem:[%s544 + $0x60] sm:$0xff]
        %v558 = vld [vmem:[%s544 + $0x68] sm:$0xff]
        %v559 = vld [vmem:[%s544 + $0x70] sm:$0xff]
        %v560 = vld [vmem:[%s544 + $0x78] sm:$0xff]
        %561 = vmatprep.subr.mxu0 0.0
        %562 = vmatpush1.msra.mxu0 %v560
        %563 = vmatprep.subr.mxu0 0.0
        %564 = vmatpush1.msra.mxu0 %v559
        %565 = vmatprep.subr.mxu0 0.0
        %566 = vmatpush1.msra.mxu0 %v558
        %567 = vmatprep.subr.mxu0 0.0
        %568 = vmatpush1.msra.mxu0 %v557
        %569 = vmatprep.subr.mxu0 0.0
        %570 = vmatpush1.msra.mxu0 %v556
        %571 = vmatprep.subr.mxu0 0.0
        %572 = vmatpush1.msra.mxu0 %v555
        %573 = vmatprep.subr.mxu0 0.0
        %574 = vmatpush1.msra.mxu0 %v554
        %575 = vmatprep.subr.mxu0 0.0
        %576 = vmatpush1.msra.mxu0 %v553
        %577 = vmatprep.subr.mxu0 0.0
        %578 = vmatpush1.msra.mxu0 %v552
        %579 = vmatprep.subr.mxu0 0.0
        %580 = vmatpush1.msra.mxu0 %v551
        %581 = vmatprep.subr.mxu0 0.0
        %582 = vmatpush1.msra.mxu0 %v550
        %583 = vmatprep.subr.mxu0 0.0
        %584 = vmatpush1.msra.mxu0 %v549
        %585 = vmatprep.subr.mxu0 0.0
        %586 = vmatpush1.msra.mxu0 %v548
        %587 = vmatprep.subr.mxu0 0.0
        %588 = vmatpush1.msra.mxu0 %v547
        %589 = vmatprep.subr.mxu0 0.0
        %590 = vmatpush1.msra.mxu0 %v546
        %591 = vmatprep.subr.mxu0 0.0
        %592 = vmatpush1.msra.mxu0 %v545
        %593 = vmatprep.subr.mxu0 0.0
        %594 = vmatpush2.msra.mxu0 0.0
        %595 = vmatprep.subr.mxu0 0.0
        %596 = vmatpush2.msra.mxu0 0.0
        %597 = vmatprep.subr.mxu0 0.0
        %598 = vmatpush2.msra.mxu0 0.0
        %599 = vmatprep.subr.mxu0 0.0
        %600 = vmatpush2.msra.mxu0 0.0
        %601 = vmatprep.subr.mxu0 0.0
        %602 = vmatpush2.msra.mxu0 0.0
        %603 = vmatprep.subr.mxu0 0.0
        %604 = vmatpush2.msra.mxu0 0.0
        %605 = vmatprep.subr.mxu0 0.0
        %606 = vmatpush2.msra.mxu0 0.0
        %607 = vmatprep.subr.mxu0 0.0
        %608 = vmatpush2.msra.mxu0 0.0
        %609 = vmatprep.subr.mxu0 0.0
        %610 = vmatpush2.msra.mxu0 0.0
        %611 = vmatprep.subr.mxu0 0.0
        %612 = vmatpush2.msra.mxu0 0.0
        %613 = vmatprep.subr.mxu0 0.0
        %614 = vmatpush2.msra.mxu0 0.0
        %615 = vmatprep.subr.mxu0 0.0
        %616 = vmatpush2.msra.mxu0 0.0
        %617 = vmatprep.subr.mxu0 0.0
        %618 = vmatpush2.msra.mxu0 0.0
        %619 = vmatprep.subr.mxu0 0.0
        %620 = vmatpush2.msra.mxu0 0.0
        %621 = vmatprep.subr.mxu0 0.0
        %622 = vmatpush2.msra.mxu0 0.0
        %623 = vmatprep.subr.mxu0 0.0
        %624 = vmatpush2.msra.mxu0 0.0
        %625 = vmatprep.mubr.f32.mxu0 0.0
        %626 = vmatmul.mubr.f32.gmra.mxu0 %v341
        %v627 = vpop.f32.mrf.mxu0
        %v628 = vadd.f32 0.0, %v627
        %v629 = vpop.f32.mrf.mxu0
        %630 = vmatprep.mubr.f32.mxu0 0.0
        %631 = vmatmul.mubr.f32.gmra.mxu0 %v342
        %v632 = vpop.f32.mrf.mxu0
        %v633 = vadd.f32 0.0, %v632
        %v634 = vpop.f32.mrf.mxu0
        %635 = vdwg.mxu0
        %636 = vmatprep.subr.mxu0 0.0
        %637 = vmatpush1.msra.mxu0 %v543
        %638 = vmatprep.subr.mxu0 0.0
        %639 = vmatpush1.msra.mxu0 %v542
        %640 = vmatprep.subr.mxu0 0.0
        %641 = vmatpush1.msra.mxu0 %v541
        %642 = vmatprep.subr.mxu0 0.0
        %643 = vmatpush1.msra.mxu0 %v540
        %644 = vmatprep.subr.mxu0 0.0
        %645 = vmatpush1.msra.mxu0 %v539
        %646 = vmatprep.subr.mxu0 0.0
        %647 = vmatpush1.msra.mxu0 %v538
        %648 = vmatprep.subr.mxu0 0.0
        %649 = vmatpush1.msra.mxu0 %v537
        %650 = vmatprep.subr.mxu0 0.0
        %651 = vmatpush1.msra.mxu0 %v536
        %652 = vmatprep.subr.mxu0 0.0
        %653 = vmatpush1.msra.mxu0 %v535
        %654 = vmatprep.subr.mxu0 0.0
        %655 = vmatpush1.msra.mxu0 %v534
        %656 = vmatprep.subr.mxu0 0.0
        %657 = vmatpush1.msra.mxu0 %v533
        %658 = vmatprep.subr.mxu0 0.0
        %659 = vmatpush1.msra.mxu0 %v532
        %660 = vmatprep.subr.mxu0 0.0
        %661 = vmatpush1.msra.mxu0 %v531
        %662 = vmatprep.subr.mxu0 0.0
        %663 = vmatpush1.msra.mxu0 %v530
        %664 = vmatprep.subr.mxu0 0.0
        %665 = vmatpush1.msra.mxu0 %v529
        %666 = vmatprep.subr.mxu0 0.0
        %667 = vmatpush1.msra.mxu0 %v528
        %668 = vmatprep.subr.mxu0 0.0
        %669 = vmatpush2.msra.mxu0 0.0
        %670 = vmatprep.subr.mxu0 0.0
        %671 = vmatpush2.msra.mxu0 0.0
        %672 = vmatprep.subr.mxu0 0.0
        %673 = vmatpush2.msra.mxu0 0.0
        %674 = vmatprep.subr.mxu0 0.0
        %675 = vmatpush2.msra.mxu0 0.0
        %676 = vmatprep.subr.mxu0 0.0
        %677 = vmatpush2.msra.mxu0 0.0
        %678 = vmatprep.subr.mxu0 0.0
        %679 = vmatpush2.msra.mxu0 0.0
        %680 = vmatprep.subr.mxu0 0.0
        %681 = vmatpush2.msra.mxu0 0.0
        %682 = vmatprep.subr.mxu0 0.0
        %683 = vmatpush2.msra.mxu0 0.0
        %684 = vmatprep.subr.mxu0 0.0
        %685 = vmatpush2.msra.mxu0 0.0
        %686 = vmatprep.subr.mxu0 0.0
        %687 = vmatpush2.msra.mxu0 0.0
        %688 = vmatprep.subr.mxu0 0.0
        %689 = vmatpush2.msra.mxu0 0.0
        %690 = vmatprep.subr.mxu0 0.0
        %691 = vmatpush2.msra.mxu0 0.0
        %692 = vmatprep.subr.mxu0 0.0
        %693 = vmatpush2.msra.mxu0 0.0
        %694 = vmatprep.subr.mxu0 0.0
        %695 = vmatpush2.msra.mxu0 0.0
        %696 = vmatprep.subr.mxu0 0.0
        %697 = vmatpush2.msra.mxu0 0.0
        %698 = vmatprep.subr.mxu0 0.0
        %699 = vmatpush2.msra.mxu0 0.0
        %700 = vmatprep.mubr.f32.mxu0 0.0
        %701 = vmatmul.mubr.f32.gmra.mxu0 %v439
        %v702 = vpop.f32.mrf.mxu0
        %v703 = vadd.f32 %v628, %v702
        %v704 = vpop.f32.mrf.mxu0
        %705 = vmatprep.mubr.f32.mxu0 0.0
        %706 = vmatmul.mubr.f32.gmra.mxu0 %v444
        %v707 = vpop.f32.mrf.mxu0
        %v708 = vadd.f32 %v633, %v707
        %v709 = vpop.f32.mrf.mxu0
        %710 = vdwg.mxu0
        %s711 = scalar_lea.vmem [#allocation5], 256
        %v712 = vld [vmem:[%s711] sm:$0xff]
        %v713 = vld [vmem:[%s711 + $0x8] sm:$0xff]
        %v714 = vld [vmem:[%s711 + $0x10] sm:$0xff]
        %v715 = vld [vmem:[%s711 + $0x18] sm:$0xff]
        %v716 = vld [vmem:[%s711 + $0x20] sm:$0xff]
        %v717 = vld [vmem:[%s711 + $0x28] sm:$0xff]
        %v718 = vld [vmem:[%s711 + $0x30] sm:$0xff]
        %v719 = vld [vmem:[%s711 + $0x38] sm:$0xff]
        %v720 = vld [vmem:[%s711 + $0x40] sm:$0xff]
        %v721 = vld [vmem:[%s711 + $0x48] sm:$0xff]
        %v722 = vld [vmem:[%s711 + $0x50] sm:$0xff]
        %v723 = vld [vmem:[%s711 + $0x58] sm:$0xff]
        %v724 = vld [vmem:[%s711 + $0x60] sm:$0xff]
        %v725 = vld [vmem:[%s711 + $0x68] sm:$0xff]
        %v726 = vld [vmem:[%s711 + $0x70] sm:$0xff]
        %v727 = vld [vmem:[%s711 + $0x78] sm:$0xff]
        %728 = vmatprep.subr.mxu0 0.0
        %729 = vmatpush1.msra.mxu0 %v727
        %730 = vmatprep.subr.mxu0 0.0
        %731 = vmatpush1.msra.mxu0 %v726
        %732 = vmatprep.subr.mxu0 0.0
        %733 = vmatpush1.msra.mxu0 %v725
        %734 = vmatprep.subr.mxu0 0.0
        %735 = vmatpush1.msra.mxu0 %v724
        %736 = vmatprep.subr.mxu0 0.0
        %737 = vmatpush1.msra.mxu0 %v723
        %738 = vmatprep.subr.mxu0 0.0
        %739 = vmatpush1.msra.mxu0 %v722
        %740 = vmatprep.subr.mxu0 0.0
        %741 = vmatpush1.msra.mxu0 %v721
        %742 = vmatprep.subr.mxu0 0.0
        %743 = vmatpush1.msra.mxu0 %v720
        %744 = vmatprep.subr.mxu0 0.0
        %745 = vmatpush1.msra.mxu0 %v719
        %746 = vmatprep.subr.mxu0 0.0
        %747 = vmatpush1.msra.mxu0 %v718
        %748 = vmatprep.subr.mxu0 0.0
        %749 = vmatpush1.msra.mxu0 %v717
        %750 = vmatprep.subr.mxu0 0.0
        %751 = vmatpush1.msra.mxu0 %v716
        %752 = vmatprep.subr.mxu0 0.0
        %753 = vmatpush1.msra.mxu0 %v715
        %754 = vmatprep.subr.mxu0 0.0
        %755 = vmatpush1.msra.mxu0 %v714
        %756 = vmatprep.subr.mxu0 0.0
        %757 = vmatpush1.msra.mxu0 %v713
        %758 = vmatprep.subr.mxu0 0.0
        %759 = vmatpush1.msra.mxu0 %v712
        %760 = vmatprep.subr.mxu0 0.0
        %761 = vmatpush2.msra.mxu0 0.0
        %762 = vmatprep.subr.mxu0 0.0
        %763 = vmatpush2.msra.mxu0 0.0
        %764 = vmatprep.subr.mxu0 0.0
        %765 = vmatpush2.msra.mxu0 0.0
        %766 = vmatprep.subr.mxu0 0.0
        %767 = vmatpush2.msra.mxu0 0.0
        %768 = vmatprep.subr.mxu0 0.0
        %769 = vmatpush2.msra.mxu0 0.0
        %770 = vmatprep.subr.mxu0 0.0
        %771 = vmatpush2.msra.mxu0 0.0
        %772 = vmatprep.subr.mxu0 0.0
        %773 = vmatpush2.msra.mxu0 0.0
        %774 = vmatprep.subr.mxu0 0.0
        %775 = vmatpush2.msra.mxu0 0.0
        %776 = vmatprep.subr.mxu0 0.0
        %777 = vmatpush2.msra.mxu0 0.0
        %778 = vmatprep.subr.mxu0 0.0
        %779 = vmatpush2.msra.mxu0 0.0
        %780 = vmatprep.subr.mxu0 0.0
        %781 = vmatpush2.msra.mxu0 0.0
        %782 = vmatprep.subr.mxu0 0.0
        %783 = vmatpush2.msra.mxu0 0.0
        %784 = vmatprep.subr.mxu0 0.0
        %785 = vmatpush2.msra.mxu0 0.0
        %786 = vmatprep.subr.mxu0 0.0
        %787 = vmatpush2.msra.mxu0 0.0
        %788 = vmatprep.subr.mxu0 0.0
        %789 = vmatpush2.msra.mxu0 0.0
        %790 = vmatprep.subr.mxu0 0.0
        %791 = vmatpush2.msra.mxu0 0.0
        %792 = vmatprep.mubr.f32.mxu0 0.0
        %793 = vmatmul.mubr.f32.gmra.mxu0 %v520
        %v794 = vpop.f32.mrf.mxu0
        %v795 = vadd.f32 0.0, %v794
        %v796 = vpop.f32.mrf.mxu0
        %797 = vmatprep.mubr.f32.mxu0 0.0
        %798 = vmatmul.mubr.f32.gmra.mxu0 %v525
        %v799 = vpop.f32.mrf.mxu0
        %v800 = vadd.f32 0.0, %v799
        %v801 = vpop.f32.mrf.mxu0
        %802 = vdwg.mxu0
        %v803 = vadd.f32 %v703, %v795
        %v804 = vadd.f32 %v708, %v800
        %v806 = vlaneseq
        %v807 = vshrl.u32 %v806, 7
        %v808 = vsub.s32 0, %v807
        %v809 = vrot.slane %v364, %v808
        %v811 = vadd.f32 %v803, %v809
        %v812 = vadd.f32 %v804, %v809
        %v813 = vmax.f32 %v811, 0.0
        %v814 = vmax.f32 %v812, 0.0
        %v815 = vmin.f32 %v813, 6.0
        %v816 = vmin.f32 %v814, 6.0
        %v817 = vld [vmem:[#allocation7] sm:$0xff]
        %v818 = vld [vmem:[#allocation7 + $0x8] sm:$0xff]
        %v819 = vld [vmem:[#allocation7 + $0x10] sm:$0xff]
        %v820 = vld [vmem:[#allocation7 + $0x18] sm:$0xff]
        %v821 = vld [vmem:[#allocation7 + $0x20] sm:$0xff]
        %v822 = vld [vmem:[#allocation7 + $0x28] sm:$0xff]
        %v823 = vld [vmem:[#allocation7 + $0x30] sm:$0xff]
        %v824 = vld [vmem:[#allocation7 + $0x38] sm:$0xff]
        %v825 = vld [vmem:[#allocation7 + $0x40] sm:$0xff]
        %v826 = vld [vmem:[#allocation7 + $0x48] sm:$0xff]
        %v827 = vld [vmem:[#allocation7 + $0x50] sm:$0xff]
        %v828 = vld [vmem:[#allocation7 + $0x58] sm:$0xff]
        %v829 = vld [vmem:[#allocation7 + $0x60] sm:$0xff]
        %v830 = vld [vmem:[#allocation7 + $0x68] sm:$0xff]
        %v831 = vld [vmem:[#allocation7 + $0x70] sm:$0xff]
        %v832 = vld [vmem:[#allocation7 + $0x78] sm:$0xff]
        %v833 = vld [vmem:[%s4] sm:$0x1]
        %v835 = vlaneseq
        %v836 = vshrl.u32 %v835, 7
        %v837 = vsub.s32 0, %v836
        %v838 = vrot.slane %v833, %v837
        %840 = vmatprep.subr.mxu0 0.0
        %841 = vmatpush1.msra.mxu0 %v832
        %842 = vmatprep.subr.mxu0 0.0
        %843 = vmatpush1.msra.mxu0 %v831
        %844 = vmatprep.subr.mxu0 0.0
        %845 = vmatpush1.msra.mxu0 %v830
        %846 = vmatprep.subr.mxu0 0.0
        %847 = vmatpush1.msra.mxu0 %v829
        %848 = vmatprep.subr.mxu0 0.0
        %849 = vmatpush1.msra.mxu0 %v828
        %850 = vmatprep.subr.mxu0 0.0
        %851 = vmatpush1.msra.mxu0 %v827
        %852 = vmatprep.subr.mxu0 0.0
        %853 = vmatpush1.msra.mxu0 %v826
        %854 = vmatprep.subr.mxu0 0.0
        %855 = vmatpush1.msra.mxu0 %v825
        %856 = vmatprep.subr.mxu0 0.0
        %857 = vmatpush1.msra.mxu0 %v824
        %858 = vmatprep.subr.mxu0 0.0
        %859 = vmatpush1.msra.mxu0 %v823
        %860 = vmatprep.subr.mxu0 0.0
        %861 = vmatpush1.msra.mxu0 %v822
        %862 = vmatprep.subr.mxu0 0.0
        %863 = vmatpush1.msra.mxu0 %v821
        %864 = vmatprep.subr.mxu0 0.0
        %865 = vmatpush1.msra.mxu0 %v820
        %866 = vmatprep.subr.mxu0 0.0
        %867 = vmatpush1.msra.mxu0 %v819
        %868 = vmatprep.subr.mxu0 0.0
        %869 = vmatpush1.msra.mxu0 %v818
        %870 = vmatprep.subr.mxu0 0.0
        %871 = vmatpush1.msra.mxu0 %v817
        %872 = vmatprep.subr.mxu0 0.0
        %873 = vmatpush2.msra.mxu0 0.0
        %874 = vmatprep.subr.mxu0 0.0
        %875 = vmatpush2.msra.mxu0 0.0
        %876 = vmatprep.subr.mxu0 0.0
        %877 = vmatpush2.msra.mxu0 0.0
        %878 = vmatprep.subr.mxu0 0.0
        %879 = vmatpush2.msra.mxu0 0.0
        %880 = vmatprep.subr.mxu0 0.0
        %881 = vmatpush2.msra.mxu0 0.0
        %882 = vmatprep.subr.mxu0 0.0
        %883 = vmatpush2.msra.mxu0 0.0
        %884 = vmatprep.subr.mxu0 0.0
        %885 = vmatpush2.msra.mxu0 0.0
        %886 = vmatprep.subr.mxu0 0.0
        %887 = vmatpush2.msra.mxu0 0.0
        %888 = vmatprep.subr.mxu0 0.0
        %889 = vmatpush2.msra.mxu0 0.0
        %890 = vmatprep.subr.mxu0 0.0
        %891 = vmatpush2.msra.mxu0 0.0
        %892 = vmatprep.subr.mxu0 0.0
        %893 = vmatpush2.msra.mxu0 0.0
        %894 = vmatprep.subr.mxu0 0.0
        %895 = vmatpush2.msra.mxu0 0.0
        %896 = vmatprep.subr.mxu0 0.0
        %897 = vmatpush2.msra.mxu0 0.0
        %898 = vmatprep.subr.mxu0 0.0
        %899 = vmatpush2.msra.mxu0 0.0
        %900 = vmatprep.subr.mxu0 0.0
        %901 = vmatpush2.msra.mxu0 0.0
        %902 = vmatprep.subr.mxu0 0.0
        %903 = vmatpush2.msra.mxu0 0.0
        %904 = vmatprep.mubr.f32.mxu0 0.0
        %905 = vmatmul.mubr.f32.gmra.mxu0 %v815
        %v906 = vpop.f32.mrf.mxu0
        %v907 = vadd.f32 %v838, %v906
        %v908 = vpop.f32.mrf.mxu0
        %909 = vmatprep.mubr.f32.mxu0 0.0
        %910 = vmatmul.mubr.f32.gmra.mxu0 %v816
        %v911 = vpop.f32.mrf.mxu0
        %v912 = vadd.f32 %v838, %v911
        %v913 = vpop.f32.mrf.mxu0
        %914 = vdwg.mxu0
        %v915 = vmax.f32 %v907, 0.0
        %v916 = vmax.f32 %v912, 0.0
        %v917 = vmin.f32 %v915, 6.0
        %v918 = vmin.f32 %v916, 6.0
        %v919 = vld [vmem:[%s6] sm:$0x1]
        %920 = vmatprep.subr.mxu0 0.0
        %921 = vmatpush1.msra.mxu0 0.0
        %922 = vmatprep.subr.mxu0 0.0
        %923 = vmatpush1.msra.mxu0 0.0
        %924 = vmatprep.subr.mxu0 0.0
        %925 = vmatpush1.msra.mxu0 0.0
        %926 = vmatprep.subr.mxu0 0.0
        %927 = vmatpush1.msra.mxu0 0.0
        %928 = vmatprep.subr.mxu0 0.0
        %929 = vmatpush1.msra.mxu0 0.0
        %930 = vmatprep.subr.mxu0 0.0
        %931 = vmatpush1.msra.mxu0 0.0
        %932 = vmatprep.subr.mxu0 0.0
        %933 = vmatpush1.msra.mxu0 0.0
        %934 = vmatprep.subr.mxu0 0.0
        %935 = vmatpush1.msra.mxu0 0.0
        %936 = vmatprep.subr.mxu0 0.0
        %937 = vmatpush1.msra.mxu0 0.0
        %938 = vmatprep.subr.mxu0 0.0
        %939 = vmatpush1.msra.mxu0 0.0
        %940 = vmatprep.subr.mxu0 0.0
        %941 = vmatpush1.msra.mxu0 0.0
        %942 = vmatprep.subr.mxu0 0.0
        %943 = vmatpush1.msra.mxu0 0.0
        %944 = vmatprep.subr.mxu0 0.0
        %945 = vmatpush1.msra.mxu0 0.0
        %946 = vmatprep.subr.mxu0 0.0
        %947 = vmatpush1.msra.mxu0 0.0
        %948 = vmatprep.subr.mxu0 0.0
        %949 = vmatpush1.msra.mxu0 %v918
        %950 = vmatprep.subr.mxu0 0.0
        %951 = vmatpush1.msra.mxu0 %v917
        %952 = vmatprep.subr.mxu0 0.0
        %953 = vmatpush2.msra.mxu0 0.0
        %954 = vmatprep.subr.mxu0 0.0
        %955 = vmatpush2.msra.mxu0 0.0
        %956 = vmatprep.subr.mxu0 0.0
        %957 = vmatpush2.msra.mxu0 0.0
        %958 = vmatprep.subr.mxu0 0.0
        %959 = vmatpush2.msra.mxu0 0.0
        %960 = vmatprep.subr.mxu0 0.0
        %961 = vmatpush2.msra.mxu0 0.0
        %962 = vmatprep.subr.mxu0 0.0
        %963 = vmatpush2.msra.mxu0 0.0
        %964 = vmatprep.subr.mxu0 0.0
        %965 = vmatpush2.msra.mxu0 0.0
        %966 = vmatprep.subr.mxu0 0.0
        %967 = vmatpush2.msra.mxu0 0.0
        %968 = vmatprep.subr.mxu0 0.0
        %969 = vmatpush2.msra.mxu0 0.0
        %970 = vmatprep.subr.mxu0 0.0
        %971 = vmatpush2.msra.mxu0 0.0
        %972 = vmatprep.subr.mxu0 0.0
        %973 = vmatpush2.msra.mxu0 0.0
        %974 = vmatprep.subr.mxu0 0.0
        %975 = vmatpush2.msra.mxu0 0.0
        %976 = vmatprep.subr.mxu0 0.0
        %977 = vmatpush2.msra.mxu0 0.0
        %978 = vmatprep.subr.mxu0 0.0
        %979 = vmatpush2.msra.mxu0 0.0
        %980 = vmatprep.subr.mxu0 0.0
        %981 = vmatpush2.msra.mxu0 0.0
        %982 = vmatprep.subr.mxu0 0.0
        %983 = vmatpush2.msra.mxu0 0.0
        %984 = vmatprep.mubr.f32.mxu0 0.0
        %985 = vmatmul.mubr.f32.gmra.mxu0 %v367
        %v986 = vpop.f32.mrf.mxu0
        %v987 = vadd.f32 0.0, %v986
        %v988 = vpop.f32.mrf.mxu0
        %989 = vmatprep.mubr.f32.mxu0 0.0
        %990 = vmatmul.mubr.f32.gmra.mxu0 %v370
        %v991 = vpop.f32.mrf.mxu0
        %v992 = vadd.f32 0.0, %v991
        %v993 = vpop.f32.mrf.mxu0
        %994 = vdwg.mxu0
        %995 = vmatprep.subr.mxu0 0.0
        %996 = vmatpush1.msra.mxu0 0.0
        %997 = vmatprep.subr.mxu0 0.0
        %998 = vmatpush1.msra.mxu0 0.0
        %999 = vmatprep.subr.mxu0 0.0
        %1000 = vmatpush1.msra.mxu0 0.0
        %1001 = vmatprep.subr.mxu0 0.0
        %1002 = vmatpush1.msra.mxu0 0.0
        %1003 = vmatprep.subr.mxu0 0.0
        %1004 = vmatpush1.msra.mxu0 0.0
        %1005 = vmatprep.subr.mxu0 0.0
        %1006 = vmatpush1.msra.mxu0 0.0
        %1007 = vmatprep.subr.mxu0 0.0
        %1008 = vmatpush1.msra.mxu0 0.0
        %1009 = vmatprep.subr.mxu0 0.0
        %1010 = vmatpush1.msra.mxu0 0.0
        %1011 = vmatprep.subr.mxu0 0.0
        %1012 = vmatpush1.msra.mxu0 0.0
        %1013 = vmatprep.subr.mxu0 0.0
        %1014 = vmatpush1.msra.mxu0 0.0
        %1015 = vmatprep.subr.mxu0 0.0
        %1016 = vmatpush1.msra.mxu0 0.0
        %1017 = vmatprep.subr.mxu0 0.0
        %1018 = vmatpush1.msra.mxu0 0.0
        %1019 = vmatprep.subr.mxu0 0.0
        %1020 = vmatpush1.msra.mxu0 0.0
        %1021 = vmatprep.subr.mxu0 0.0
        %1022 = vmatpush1.msra.mxu0 0.0
        %1023 = vmatprep.subr.mxu0 0.0
        %1024 = vmatpush1.msra.mxu0 %v918
        %1025 = vmatprep.subr.mxu0 0.0
        %1026 = vmatpush1.msra.mxu0 %v917
        %1027 = vmatprep.subr.mxu0 0.0
        %1028 = vmatpush2.msra.mxu0 0.0
        %1029 = vmatprep.subr.mxu0 0.0
        %1030 = vmatpush2.msra.mxu0 0.0
        %1031 = vmatprep.subr.mxu0 0.0
        %1032 = vmatpush2.msra.mxu0 0.0
        %1033 = vmatprep.subr.mxu0 0.0
        %1034 = vmatpush2.msra.mxu0 0.0
        %1035 = vmatprep.subr.mxu0 0.0
        %1036 = vmatpush2.msra.mxu0 0.0
        %1037 = vmatprep.subr.mxu0 0.0
        %1038 = vmatpush2.msra.mxu0 0.0
        %1039 = vmatprep.subr.mxu0 0.0
        %1040 = vmatpush2.msra.mxu0 0.0
        %1041 = vmatprep.subr.mxu0 0.0
        %1042 = vmatpush2.msra.mxu0 0.0
        %1043 = vmatprep.subr.mxu0 0.0
        %1044 = vmatpush2.msra.mxu0 0.0
        %1045 = vmatprep.subr.mxu0 0.0
        %1046 = vmatpush2.msra.mxu0 0.0
        %1047 = vmatprep.subr.mxu0 0.0
        %1048 = vmatpush2.msra.mxu0 0.0
        %1049 = vmatprep.subr.mxu0 0.0
        %1050 = vmatpush2.msra.mxu0 0.0
        %1051 = vmatprep.subr.mxu0 0.0
        %1052 = vmatpush2.msra.mxu0 0.0
        %1053 = vmatprep.subr.mxu0 0.0
        %1054 = vmatpush2.msra.mxu0 0.0
        %1055 = vmatprep.subr.mxu0 0.0
        %1056 = vmatpush2.msra.mxu0 0.0
        %1057 = vmatprep.subr.mxu0 0.0
        %1058 = vmatpush2.msra.mxu0 0.0
        %1059 = vmatprep.mubr.f32.mxu0 0.0
        %1060 = vmatmul.mubr.f32.gmra.mxu0 %v448
        %v1061 = vpop.f32.mrf.mxu0
        %v1062 = vadd.f32 0.0, %v1061
        %v1063 = vpop.f32.mrf.mxu0
        %1064 = vmatprep.mubr.f32.mxu0 0.0
        %1065 = vmatmul.mubr.f32.gmra.mxu0 %v451
        %v1066 = vpop.f32.mrf.mxu0
        %v1067 = vadd.f32 0.0, %v1066
        %v1068 = vpop.f32.mrf.mxu0
        %1069 = vdwg.mxu0
        %v1070 = vld [vmem:[#allocation8] sm:$0xff]
        %v1071 = vld [vmem:[#allocation8 + $0x8] sm:$0xff]
        %v1072 = vld [vmem:[#allocation8 + $0x10] sm:$0xff]
        %v1073 = vld [vmem:[#allocation8 + $0x18] sm:$0xff]
        %v1074 = vld [vmem:[#allocation8 + $0x20] sm:$0xff]
        %v1075 = vld [vmem:[#allocation8 + $0x28] sm:$0xff]
        %v1076 = vld [vmem:[#allocation8 + $0x30] sm:$0xff]
        %v1077 = vld [vmem:[#allocation8 + $0x38] sm:$0xff]
        %v1078 = vld [vmem:[#allocation8 + $0x40] sm:$0xff]
        %v1079 = vld [vmem:[#allocation8 + $0x48] sm:$0xff]
        %v1080 = vld [vmem:[#allocation8 + $0x50] sm:$0xff]
        %v1081 = vld [vmem:[#allocation8 + $0x58] sm:$0xff]
        %v1082 = vld [vmem:[#allocation8 + $0x60] sm:$0xff]
        %v1083 = vld [vmem:[#allocation8 + $0x68] sm:$0xff]
        %v1084 = vld [vmem:[#allocation8 + $0x70] sm:$0xff]
        %v1085 = vld [vmem:[#allocation8 + $0x78] sm:$0xff]
        %s1086 = scalar_lea.vmem [#allocation8], 128
        %v1087 = vld [vmem:[%s1086] sm:$0xff]
        %v1088 = vld [vmem:[%s1086 + $0x8] sm:$0xff]
        %v1089 = vld [vmem:[%s1086 + $0x10] sm:$0xff]
        %v1090 = vld [vmem:[%s1086 + $0x18] sm:$0xff]
        %v1091 = vld [vmem:[%s1086 + $0x20] sm:$0xff]
        %v1092 = vld [vmem:[%s1086 + $0x28] sm:$0xff]
        %v1093 = vld [vmem:[%s1086 + $0x30] sm:$0xff]
        %v1094 = vld [vmem:[%s1086 + $0x38] sm:$0xff]
        %v1095 = vld [vmem:[%s1086 + $0x40] sm:$0xff]
        %v1096 = vld [vmem:[%s1086 + $0x48] sm:$0xff]
        %v1097 = vld [vmem:[%s1086 + $0x50] sm:$0xff]
        %v1098 = vld [vmem:[%s1086 + $0x58] sm:$0xff]
        %v1099 = vld [vmem:[%s1086 + $0x60] sm:$0xff]
        %v1100 = vld [vmem:[%s1086 + $0x68] sm:$0xff]
        %v1101 = vld [vmem:[%s1086 + $0x70] sm:$0xff]
        %v1102 = vld [vmem:[%s1086 + $0x78] sm:$0xff]
        %1103 = vmatprep.subr.mxu0 0.0
        %1104 = vmatpush1.msra.mxu0 %v1102
        %1105 = vmatprep.subr.mxu0 0.0
        %1106 = vmatpush1.msra.mxu0 %v1101
        %1107 = vmatprep.subr.mxu0 0.0
        %1108 = vmatpush1.msra.mxu0 %v1100
        %1109 = vmatprep.subr.mxu0 0.0
        %1110 = vmatpush1.msra.mxu0 %v1099
        %1111 = vmatprep.subr.mxu0 0.0
        %1112 = vmatpush1.msra.mxu0 %v1098
        %1113 = vmatprep.subr.mxu0 0.0
        %1114 = vmatpush1.msra.mxu0 %v1097
        %1115 = vmatprep.subr.mxu0 0.0
        %1116 = vmatpush1.msra.mxu0 %v1096
        %1117 = vmatprep.subr.mxu0 0.0
        %1118 = vmatpush1.msra.mxu0 %v1095
        %1119 = vmatprep.subr.mxu0 0.0
        %1120 = vmatpush1.msra.mxu0 %v1094
        %1121 = vmatprep.subr.mxu0 0.0
        %1122 = vmatpush1.msra.mxu0 %v1093
        %1123 = vmatprep.subr.mxu0 0.0
        %1124 = vmatpush1.msra.mxu0 %v1092
        %1125 = vmatprep.subr.mxu0 0.0
        %1126 = vmatpush1.msra.mxu0 %v1091
        %1127 = vmatprep.subr.mxu0 0.0
        %1128 = vmatpush1.msra.mxu0 %v1090
        %1129 = vmatprep.subr.mxu0 0.0
        %1130 = vmatpush1.msra.mxu0 %v1089
        %1131 = vmatprep.subr.mxu0 0.0
        %1132 = vmatpush1.msra.mxu0 %v1088
        %1133 = vmatprep.subr.mxu0 0.0
        %1134 = vmatpush1.msra.mxu0 %v1087
        %1135 = vmatprep.subr.mxu0 0.0
        %1136 = vmatpush2.msra.mxu0 0.0
        %1137 = vmatprep.subr.mxu0 0.0
        %1138 = vmatpush2.msra.mxu0 0.0
        %1139 = vmatprep.subr.mxu0 0.0
        %1140 = vmatpush2.msra.mxu0 0.0
        %1141 = vmatprep.subr.mxu0 0.0
        %1142 = vmatpush2.msra.mxu0 0.0
        %1143 = vmatprep.subr.mxu0 0.0
        %1144 = vmatpush2.msra.mxu0 0.0
        %1145 = vmatprep.subr.mxu0 0.0
        %1146 = vmatpush2.msra.mxu0 0.0
        %1147 = vmatprep.subr.mxu0 0.0
        %1148 = vmatpush2.msra.mxu0 0.0
        %1149 = vmatprep.subr.mxu0 0.0
        %1150 = vmatpush2.msra.mxu0 0.0
        %1151 = vmatprep.subr.mxu0 0.0
        %1152 = vmatpush2.msra.mxu0 0.0
        %1153 = vmatprep.subr.mxu0 0.0
        %1154 = vmatpush2.msra.mxu0 0.0
        %1155 = vmatprep.subr.mxu0 0.0
        %1156 = vmatpush2.msra.mxu0 0.0
        %1157 = vmatprep.subr.mxu0 0.0
        %1158 = vmatpush2.msra.mxu0 0.0
        %1159 = vmatprep.subr.mxu0 0.0
        %1160 = vmatpush2.msra.mxu0 0.0
        %1161 = vmatprep.subr.mxu0 0.0
        %1162 = vmatpush2.msra.mxu0 0.0
        %1163 = vmatprep.subr.mxu0 0.0
        %1164 = vmatpush2.msra.mxu0 0.0
        %1165 = vmatprep.subr.mxu0 0.0
        %1166 = vmatpush2.msra.mxu0 0.0
        %1167 = vmatprep.mubr.f32.mxu0 0.0
        %1168 = vmatmul.mubr.f32.gmra.mxu0 %v917
        %v1169 = vpop.f32.mrf.mxu0
        %v1170 = vadd.f32 0.0, %v1169
        %v1171 = vpop.f32.mrf.mxu0
        %1172 = vmatprep.mubr.f32.mxu0 0.0
        %1173 = vmatmul.mubr.f32.gmra.mxu0 %v918
        %v1174 = vpop.f32.mrf.mxu0
        %v1175 = vadd.f32 0.0, %v1174
        %v1176 = vpop.f32.mrf.mxu0
        %1177 = vdwg.mxu0
        %1178 = vmatprep.subr.mxu0 0.0
        %1179 = vmatpush1.msra.mxu0 %v1085
        %1180 = vmatprep.subr.mxu0 0.0
        %1181 = vmatpush1.msra.mxu0 %v1084
        %1182 = vmatprep.subr.mxu0 0.0
        %1183 = vmatpush1.msra.mxu0 %v1083
        %1184 = vmatprep.subr.mxu0 0.0
        %1185 = vmatpush1.msra.mxu0 %v1082
        %1186 = vmatprep.subr.mxu0 0.0
        %1187 = vmatpush1.msra.mxu0 %v1081
        %1188 = vmatprep.subr.mxu0 0.0
        %1189 = vmatpush1.msra.mxu0 %v1080
        %1190 = vmatprep.subr.mxu0 0.0
        %1191 = vmatpush1.msra.mxu0 %v1079
        %1192 = vmatprep.subr.mxu0 0.0
        %1193 = vmatpush1.msra.mxu0 %v1078
        %1194 = vmatprep.subr.mxu0 0.0
        %1195 = vmatpush1.msra.mxu0 %v1077
        %1196 = vmatprep.subr.mxu0 0.0
        %1197 = vmatpush1.msra.mxu0 %v1076
        %1198 = vmatprep.subr.mxu0 0.0
        %1199 = vmatpush1.msra.mxu0 %v1075
        %1200 = vmatprep.subr.mxu0 0.0
        %1201 = vmatpush1.msra.mxu0 %v1074
        %1202 = vmatprep.subr.mxu0 0.0
        %1203 = vmatpush1.msra.mxu0 %v1073
        %1204 = vmatprep.subr.mxu0 0.0
        %1205 = vmatpush1.msra.mxu0 %v1072
        %1206 = vmatprep.subr.mxu0 0.0
        %1207 = vmatpush1.msra.mxu0 %v1071
        %1208 = vmatprep.subr.mxu0 0.0
        %1209 = vmatpush1.msra.mxu0 %v1070
        %1210 = vmatprep.subr.mxu0 0.0
        %1211 = vmatpush2.msra.mxu0 0.0
        %1212 = vmatprep.subr.mxu0 0.0
        %1213 = vmatpush2.msra.mxu0 0.0
        %1214 = vmatprep.subr.mxu0 0.0
        %1215 = vmatpush2.msra.mxu0 0.0
        %1216 = vmatprep.subr.mxu0 0.0
        %1217 = vmatpush2.msra.mxu0 0.0
        %1218 = vmatprep.subr.mxu0 0.0
        %1219 = vmatpush2.msra.mxu0 0.0
        %1220 = vmatprep.subr.mxu0 0.0
        %1221 = vmatpush2.msra.mxu0 0.0
        %1222 = vmatprep.subr.mxu0 0.0
        %1223 = vmatpush2.msra.mxu0 0.0
        %1224 = vmatprep.subr.mxu0 0.0
        %1225 = vmatpush2.msra.mxu0 0.0
        %1226 = vmatprep.subr.mxu0 0.0
        %1227 = vmatpush2.msra.mxu0 0.0
        %1228 = vmatprep.subr.mxu0 0.0
        %1229 = vmatpush2.msra.mxu0 0.0
        %1230 = vmatprep.subr.mxu0 0.0
        %1231 = vmatpush2.msra.mxu0 0.0
        %1232 = vmatprep.subr.mxu0 0.0
        %1233 = vmatpush2.msra.mxu0 0.0
        %1234 = vmatprep.subr.mxu0 0.0
        %1235 = vmatpush2.msra.mxu0 0.0
        %1236 = vmatprep.subr.mxu0 0.0
        %1237 = vmatpush2.msra.mxu0 0.0
        %1238 = vmatprep.subr.mxu0 0.0
        %1239 = vmatpush2.msra.mxu0 0.0
        %1240 = vmatprep.subr.mxu0 0.0
        %1241 = vmatpush2.msra.mxu0 0.0
        %1242 = vmatprep.mubr.f32.mxu0 0.0
        %1243 = vmatmul.mubr.f32.gmra.mxu0 %v987
        %v1244 = vpop.f32.mrf.mxu0
        %v1245 = vadd.f32 %v1170, %v1244
        %v1246 = vpop.f32.mrf.mxu0
        %1247 = vmatprep.mubr.f32.mxu0 0.0
        %1248 = vmatmul.mubr.f32.gmra.mxu0 %v992
        %v1249 = vpop.f32.mrf.mxu0
        %v1250 = vadd.f32 %v1175, %v1249
        %v1251 = vpop.f32.mrf.mxu0
        %1252 = vdwg.mxu0
        %s1253 = scalar_lea.vmem [#allocation8], 256
        %v1254 = vld [vmem:[%s1253] sm:$0xff]
        %v1255 = vld [vmem:[%s1253 + $0x8] sm:$0xff]
        %v1256 = vld [vmem:[%s1253 + $0x10] sm:$0xff]
        %v1257 = vld [vmem:[%s1253 + $0x18] sm:$0xff]
        %v1258 = vld [vmem:[%s1253 + $0x20] sm:$0xff]
        %v1259 = vld [vmem:[%s1253 + $0x28] sm:$0xff]
        %v1260 = vld [vmem:[%s1253 + $0x30] sm:$0xff]
        %v1261 = vld [vmem:[%s1253 + $0x38] sm:$0xff]
        %v1262 = vld [vmem:[%s1253 + $0x40] sm:$0xff]
        %v1263 = vld [vmem:[%s1253 + $0x48] sm:$0xff]
        %v1264 = vld [vmem:[%s1253 + $0x50] sm:$0xff]
        %v1265 = vld [vmem:[%s1253 + $0x58] sm:$0xff]
        %v1266 = vld [vmem:[%s1253 + $0x60] sm:$0xff]
        %v1267 = vld [vmem:[%s1253 + $0x68] sm:$0xff]
        %v1268 = vld [vmem:[%s1253 + $0x70] sm:$0xff]
        %v1269 = vld [vmem:[%s1253 + $0x78] sm:$0xff]
        %1270 = vmatprep.subr.mxu0 0.0
        %1271 = vmatpush1.msra.mxu0 %v1269
        %1272 = vmatprep.subr.mxu0 0.0
        %1273 = vmatpush1.msra.mxu0 %v1268
        %1274 = vmatprep.subr.mxu0 0.0
        %1275 = vmatpush1.msra.mxu0 %v1267
        %1276 = vmatprep.subr.mxu0 0.0
        %1277 = vmatpush1.msra.mxu0 %v1266
        %1278 = vmatprep.subr.mxu0 0.0
        %1279 = vmatpush1.msra.mxu0 %v1265
        %1280 = vmatprep.subr.mxu0 0.0
        %1281 = vmatpush1.msra.mxu0 %v1264
        %1282 = vmatprep.subr.mxu0 0.0
        %1283 = vmatpush1.msra.mxu0 %v1263
        %1284 = vmatprep.subr.mxu0 0.0
        %1285 = vmatpush1.msra.mxu0 %v1262
        %1286 = vmatprep.subr.mxu0 0.0
        %1287 = vmatpush1.msra.mxu0 %v1261
        %1288 = vmatprep.subr.mxu0 0.0
        %1289 = vmatpush1.msra.mxu0 %v1260
        %1290 = vmatprep.subr.mxu0 0.0
        %1291 = vmatpush1.msra.mxu0 %v1259
        %1292 = vmatprep.subr.mxu0 0.0
        %1293 = vmatpush1.msra.mxu0 %v1258
        %1294 = vmatprep.subr.mxu0 0.0
        %1295 = vmatpush1.msra.mxu0 %v1257
        %1296 = vmatprep.subr.mxu0 0.0
        %1297 = vmatpush1.msra.mxu0 %v1256
        %1298 = vmatprep.subr.mxu0 0.0
        %1299 = vmatpush1.msra.mxu0 %v1255
        %1300 = vmatprep.subr.mxu0 0.0
        %1301 = vmatpush1.msra.mxu0 %v1254
        %1302 = vmatprep.subr.mxu0 0.0
        %1303 = vmatpush2.msra.mxu0 0.0
        %1304 = vmatprep.subr.mxu0 0.0
        %1305 = vmatpush2.msra.mxu0 0.0
        %1306 = vmatprep.subr.mxu0 0.0
        %1307 = vmatpush2.msra.mxu0 0.0
        %1308 = vmatprep.subr.mxu0 0.0
        %1309 = vmatpush2.msra.mxu0 0.0
        %1310 = vmatprep.subr.mxu0 0.0
        %1311 = vmatpush2.msra.mxu0 0.0
        %1312 = vmatprep.subr.mxu0 0.0
        %1313 = vmatpush2.msra.mxu0 0.0
        %1314 = vmatprep.subr.mxu0 0.0
        %1315 = vmatpush2.msra.mxu0 0.0
        %1316 = vmatprep.subr.mxu0 0.0
        %1317 = vmatpush2.msra.mxu0 0.0
        %1318 = vmatprep.subr.mxu0 0.0
        %1319 = vmatpush2.msra.mxu0 0.0
        %1320 = vmatprep.subr.mxu0 0.0
        %1321 = vmatpush2.msra.mxu0 0.0
        %1322 = vmatprep.subr.mxu0 0.0
        %1323 = vmatpush2.msra.mxu0 0.0
        %1324 = vmatprep.subr.mxu0 0.0
        %1325 = vmatpush2.msra.mxu0 0.0
        %1326 = vmatprep.subr.mxu0 0.0
        %1327 = vmatpush2.msra.mxu0 0.0
        %1328 = vmatprep.subr.mxu0 0.0
        %1329 = vmatpush2.msra.mxu0 0.0
        %1330 = vmatprep.subr.mxu0 0.0
        %1331 = vmatpush2.msra.mxu0 0.0
        %1332 = vmatprep.subr.mxu0 0.0
        %1333 = vmatpush2.msra.mxu0 0.0
        %1334 = vmatprep.mubr.f32.mxu0 0.0
        %1335 = vmatmul.mubr.f32.gmra.mxu0 %v1062
        %v1336 = vpop.f32.mrf.mxu0
        %v1337 = vadd.f32 0.0, %v1336
        %v1338 = vpop.f32.mrf.mxu0
        %1339 = vmatprep.mubr.f32.mxu0 0.0
        %1340 = vmatmul.mubr.f32.gmra.mxu0 %v1067
        %v1341 = vpop.f32.mrf.mxu0
        %v1342 = vadd.f32 0.0, %v1341
        %v1343 = vpop.f32.mrf.mxu0
        %1344 = vdwg.mxu0
        %v1345 = vadd.f32 %v1245, %v1337
        %v1346 = vadd.f32 %v1250, %v1342
        %v1348 = vlaneseq
        %v1349 = vshrl.u32 %v1348, 7
        %v1350 = vsub.s32 0, %v1349
        %v1351 = vrot.slane %v919, %v1350
        %v1353 = vadd.f32 %v1345, %v1351
        %v1354 = vadd.f32 %v1346, %v1351
        %v1355 = vadd.f32 %v1353, %v341
        %v1356 = vadd.f32 %v1354, %v342
        %1357 = vst [vmem:[%s340] sm:$0xff] %v1355
        %1358 = vst [vmem:[%s340 + $0x8] sm:$0xff] %v1356
        %s1359 = sand.u32 %s186, 1
        %s1360 = scalar_lea.sflag [#allocation4], %s1359
        %s1361 = sand.u32 %s186, 1
        %s1362 = smul.addr %s1361, 16
        %s1363 = scalar_lea.vmem [#allocation10], %s1362
        // Predicated region
        $region65: #{tpu_custom_call.1} parent=47 // pred_check
          %p1364 = pneg %p196
        $region66: #{tpu_custom_call.1} parent=47 // pred_check_branch
          %1366 = sbr.rel (%p1364) target = $region68
        $region67: #{tpu_custom_call.1} parent=47 // pred_region
          %s1368 = ssub.s32 256, 256
          %1369 = vsyncadd %s1360, %s1368
          %s1370 = smul.addr %s26, 2
          %s1371 = smul.addr %s1370, 128
          %s1372 = scalar_lea.hbm %s7, %s1371
          %s1373 = sshll.u32 %s1363, 4
          %s1374 = int_to_ptr.vmem [resolvable:$true] %s1373
          %1379 = dma.vmem_to_hbm [thread:$0]  %s1374, 256, %s1372, %s1360, 128, 128, 8
        $region68: #{tpu_custom_call.1} parent=47 // pred_fallthru
          _
      $region48: #{tpu_custom_call.1} parent=5 // pred_fallthru
        _
      %p1380 = scmp.le.s32.totalorder 2, %s21
      // Predicated region
      $region69: #{tpu_custom_call.1} parent=5 // pred_check
        %p1381 = pneg %p1380
      $region70: #{tpu_custom_call.1} parent=5 // pred_check_branch
        %1383 = sbr.rel (%p1381) target = $region72
      $region71: #{tpu_custom_call.1} parent=5 // pred_region
        %s1384 = ssub.s32 %s21, 2
        // Predicated region
        $region73: #{tpu_custom_call.1} parent=71 // pred_check
          %p1385 = pneg %p202
        $region74: #{tpu_custom_call.1} parent=71 // pred_check_branch
          %1387 = sbr.rel (%p1385) target = $region76
        $region75: #{tpu_custom_call.1} parent=71 // pred_region
          %s1388 = sand.u32 %s187, 1
          %s1389 = scalar_lea.sflag [#allocation4], %s1388
          %s1390 = sand.u32 %s187, 1
          %s1391 = smul.addr %s1390, 16
          %s1392 = scalar_lea.vmem [#allocation10], %s1391
          %1393 = dma.done %s1389, 256
        $region76: #{tpu_custom_call.1} parent=71 // pred_fallthru
          _
      $region72: #{tpu_custom_call.1} parent=5 // pred_fallthru
        _
    $region6: #{tpu_custom_call.1} parent=1 // loop_footer
      %s25 = sadd.s32 1, %s21
    $region7: #{tpu_custom_call.1} parent=1 // loop_footer_branch
      %20 = sbr.rel target = $region3
    $region8: #{tpu_custom_call.1} parent=1 // loop_exit
      _
    %1394 = vsyncpa [#allocation3], 1
    %s1395 = scalar_lea.sflag [#allocation3], 1
    %1396 = vsyncpa %s1395, 1
    %1397 = vsyncpa [#allocation6], 1
    %1398 = vsyncpa [#allocation9], 1
    %1399 = vsyncpa [#allocation4], 1
    %s1400 = scalar_lea.sflag [#allocation4], 1
    %1401 = vsyncpa %s1400, 1

</llo_original>
